<compile_context>
chip_gen: v7x
topology: tpu7x:2x2x1
jax: 0.10.0
libtpu: 0.0.40
codegen_flags: <defaults>
</compile_context>

<pallas_src>
import functools

import numpy as np

import jax
import jax.numpy as jnp
from jax.experimental import pallas as pl
from jax.experimental.pallas import tpu as pltpu

CONV_HID = 64          # channels out of conv3
HEAD_HID = 64          # actor / critic hidden width
HEAD_W = 2 * HEAD_HID  # merged actor||critic hidden -> exactly 128 lanes

_INV255 = np.float32(1.0 / 255.0)


# ----------------------------------------------------------------------------
# The fused kernel (one grid step == Bt samples, batch on the sublane axis)
# ----------------------------------------------------------------------------
def _fused_forward_kernel(even_ref, odd_ref, extra_ref,
                          m1_ref, b1_ref, m2_ref, b2_ref, m3_ref, b3_ref,
                          w1i_ref, w1e_ref, bh1_ref, w2_ref, bh2_ref,
                          out_ref, *, act_dim, hp, h2, h3, half):
    dot = functools.partial(jnp.dot, preferred_element_type=jnp.float32)
    bf16 = jnp.bfloat16

    # hoist grid-invariant weight loads out of the unrolled loops
    m1k0 = m1_ref[0]                      # [W*3, 2*half]  bf16  (kh=0: even|odd)
    m1k1 = m1_ref[1]                      # [W*3, 2*half]  bf16  (kh=1: even|odd)
    b1 = b1_ref[...]                      # [1, half]      f32
    m20, m21, b2 = m2_ref[0], m2_ref[1], b2_ref[...]
    m30, m31, b3 = m3_ref[0], m3_ref[1], b3_ref[...]

    # ---- conv1(3->16, 2x2) + ReLU + MaxPool(2x2), fused; one pooled row / y --
    pooled = []
    for y in range(hp):                   # static unrolled (hp is tiny)
        s0 = even_ref[y]                  # image rows 2y   : [Bt, W*3] bf16
        s1 = odd_ref[y]                   # image rows 2y+1
        s2 = even_ref[y + 1]              # image rows 2y+2
        # each product is [Bt, 2*half] = [even-parity cols | odd-parity cols]
        z_top = dot(s0, m1k0) + dot(s1, m1k1)      # conv row 2y
        z_bot = dot(s1, m1k0) + dot(s2, m1k1)      # conv row 2y+1
        z = jnp.maximum(z_top, z_bot)
        z = jnp.maximum(z[:, :half], z[:, half:])  # max over column parity
        pooled.append(jnp.maximum(z + b1, 0.0).astype(bf16))   # [Bt, wp*16]

    # ---- conv2(16->32, 2x2) + ReLU ------------------------------------------
    c2 = []
    for y in range(h2):
        c = dot(pooled[y], m20) + dot(pooled[y + 1], m21) + b2
        c2.append(jnp.maximum(c, 0.0).astype(bf16))             # [Bt, w2o*32]

    # ---- conv3(32->64, 2x2) + ReLU ------------------------------------------
    c3 = []
    for y in range(h3):
        c = dot(c2[y], m30) + dot(c2[y + 1], m31) + b3
        c3.append(jnp.maximum(c, 0.0).astype(bf16))             # [Bt, w3o*64]

    # flatten conv3 output in (y, x, c) order as one wide lane-concat so the
    # head is a single contraction (no per-row serialized matmuls).
    c3cat = c3[0] if h3 == 1 else jnp.concatenate(c3, axis=1)   # [Bt, h3*w3o*64]

    # ---- merged actor||critic first layer + tanh (exactly 128 lanes) --------
    acc = (dot(c3cat, w1i_ref[...]) + dot(extra_ref[...], w1e_ref[...])
           + bh1_ref[...])                                      # [Bt, 128] f32
    h = jnp.tanh(acc)

    # ---- merged second layer -> [log_softmax logits | value | zero pad] -----
    head = dot(h.astype(bf16), w2_ref[...]) + bh2_ref[...]      # [Bt, 128] f32
    col = jax.lax.broadcasted_iota(jnp.int32, head.shape, 1)
    is_logit = col < act_dim
    mmax = jnp.max(jnp.where(is_logit, head, jnp.float32(-1e30)),
                   axis=-1, keepdims=True)
    e = jnp.where(is_logit, jnp.exp(head - mmax), 0.0)
    lse = jnp.log(jnp.sum(e, axis=-1, keepdims=True))
    logp = head - mmax - lse
    out_ref[...] = jnp.where(is_logit, logp,
                             jnp.where(col == act_dim, head, 0.0))


# ----------------------------------------------------------------------------
# Host-side weight packing (banded conv matrices, merged heads)
# ----------------------------------------------------------------------------
def _banded_conv_mats(w, *, in_w, out_w, stride=1, offset=0, scale=np.float32(1.0)):
    """w: [Co, Ci, 2, 2] (torch Conv2d layout).  Returns [M_0, M_1] with
    M_i[(stride*x + offset + j)*Ci + ci, x*Co + co] = w[co, ci, i, j] * scale,
    so `rows @ M_i` computes the kh=i slice of the conv for a slab laid out
    as [rows, x*Ci + ci]."""
    w = np.asarray(w, np.float32)
    co, ci, kh, kw = w.shape
    mats = []
    for i in range(kh):
        mat = np.zeros((in_w * ci, out_w * co), np.float32)
        for x in range(out_w):
            for j in range(kw):
                xin = stride * x + offset + j
                mat[xin * ci:(xin + 1) * ci, x * co:(x + 1) * co] = \
                    w[:, :, i, j].T * scale
        mats.append(mat)
    return mats


def _tiled_bias(b, out_w):
    return jnp.asarray(np.tile(np.asarray(b, np.float32), out_w)[None, :])


def _init_conv(key, co, ci):
    kw_, kb_ = jax.random.split(key)
    bound = 1.0 / float(np.sqrt(ci * 4))      # torch Conv2d default-style init
    w = jax.random.uniform(kw_, (co, ci, 2, 2), jnp.float32, -bound, bound)
    b = jax.random.uniform(kb_, (co,), jnp.float32, -bound, bound)
    return w, b


def _init_linear(key, out_f, in_f):
    # init_params: weight ~ N(0,1), row-normalized over in-features, bias = 0.
    w = jax.random.normal(key, (out_f, in_f), jnp.float32)
    w = w / jnp.sqrt(jnp.sum(w * w, axis=1, keepdims=True))
    return w, jnp.zeros((out_f,), jnp.float32)


def build_params(key, n, m, act_dim, sr_single):
    H, W = n, m
    hp, wp = (H - 1) // 2, (W - 1) // 2
    h2, w2o = hp - 1, wp - 1
    h3, w3o = h2 - 1, w2o - 1
    assert h3 >= 1 and w3o >= 1, "obs image too small for the conv stack"
    img_emb = h3 * w3o * CONV_HID
    assert img_emb == ((n - 1) // 2 - 2) * ((m - 1) // 2 - 2) * CONV_HID
    emb = img_emb + sr_single + 1             # image ++ SR ++ direction
    assert act_dim + 1 <= HEAD_W

    ks = jax.random.split(key, 7)
    c1_w, c1_b = _init_conv(ks[0], 16, 3)
    c2_w, c2_b = _init_conv(ks[1], 32, 16)
    c3_w, c3_b = _init_conv(ks[2], CONV_HID, 32)
    a1_w, a1_b = _init_linear(ks[3], HEAD_HID, emb)
    a2_w, a2_b = _init_linear(ks[4], act_dim, HEAD_HID)
    v1_w, v1_b = _init_linear(ks[5], HEAD_HID, emb)
    v2_w, v2_b = _init_linear(ks[6], 1, HEAD_HID)

    # conv1 + pool banded matrices; the rgb /255 scale is folded in here.
    # Parity halves are lane-concatenated: m1[kh] = [M(kh, even) | M(kh, odd)].
    p0 = _banded_conv_mats(c1_w, in_w=W, out_w=wp, stride=2, offset=0,
                           scale=_INV255)
    p1 = _banded_conv_mats(c1_w, in_w=W, out_w=wp, stride=2, offset=1,
                           scale=_INV255)
    m1 = np.stack([np.concatenate([p0[0], p1[0]], axis=1),
                   np.concatenate([p0[1], p1[1]], axis=1)])    # [2, W*3, 2*wp*16]
    m2 = np.stack(_banded_conv_mats(c2_w, in_w=wp, out_w=w2o))
    m3 = np.stack(_banded_conv_mats(c3_w, in_w=w2o, out_w=w3o))

    # merged actor||critic heads (128-lane dense)
    w1 = jnp.concatenate([a1_w.T, v1_w.T], axis=1)              # [emb, 128]
    w1i = w1[:img_emb]
    w1e = w1[img_emb:]                                          # [SR_size, 128]
    bh1 = jnp.concatenate([a1_b, v1_b])[None, :]                # [1, 128]
    w2h = np.zeros((HEAD_W, HEAD_W), np.float32)
    w2h[:HEAD_HID, :act_dim] = np.asarray(a2_w).T
    w2h[HEAD_HID:, act_dim] = np.asarray(v2_w)[0]
    bh2 = np.zeros((1, HEAD_W), np.float32)
    bh2[0, :act_dim] = np.asarray(a2_b)
    bh2[0, act_dim] = float(np.asarray(v2_b)[0])

    bf = jnp.bfloat16
    params = dict(
        m1=jnp.asarray(m1, bf),                 # [2, W*3, 2*wp*16]
        b1=_tiled_bias(c1_b, wp),               # [1, wp*16] f32
        m2=jnp.asarray(m2, bf),                 # [2, wp*16, w2o*32]
        b2=_tiled_bias(c2_b, w2o),
        m3=jnp.asarray(m3, bf),                 # [2, w2o*32, w3o*64]
        b3=_tiled_bias(c3_b, w3o),
        w1i=w1i.astype(bf), w1e=w1e.astype(bf), bh1=bh1,
        w2=jnp.asarray(w2h, bf), bh2=jnp.asarray(bh2),
    )
    raw = dict(c1_w=c1_w, c1_b=c1_b, c2_w=c2_w, c2_b=c2_b, c3_w=c3_w, c3_b=c3_b,
               a1_w=a1_w, a1_b=a1_b, a2_w=a2_w, a2_b=a2_b,
               v1_w=v1_w, v1_b=v1_b, v2_w=v2_w, v2_b=v2_b)
    return params, raw


def _round_up(x, k):
    return (x + k - 1) // k * k


# ----------------------------------------------------------------------------
# Forward pass (ACModelSR.forward, with_CV=True, rgb=True, SR_size > 0)
# ----------------------------------------------------------------------------
def acmodel_sr_forward(params, image, sr, direction, *, act_dim, block_b=64):
    """image: [B, H, W, 3] in [0, 255]; sr: [B, SR_single]; direction: [B].
    Returns (log_softmax logits of the Categorical policy, value)."""
    B, H, W, C = image.shape
    assert C == 3
    hp, wp = (H - 1) // 2, (W - 1) // 2
    h2, w2o = hp - 1, wp - 1
    h3, w3o = h2 - 1, w2o - 1
    half = wp * 16
    row_w = w3o * CONV_HID
    e_dim = params["w1e"].shape[0]
    assert params["m1"].shape == (2, W * 3, 2 * half)
    assert params["w1i"].shape == (h3 * row_w, HEAD_W)
    assert sr.shape == (B, e_dim - 1)

    # batch tile: multiple of 16 so f32 (8) and bf16 (16) sublane tiling is clean
    bt = min(_round_up(block_b, 16), _round_up(B, 16))
    b_pad = _round_up(B, bt)
    n_steps = b_pad // bt

    bf = jnp.bfloat16
    # ship bf16 (raw 0..255 values: /255 is folded into the conv1 weights)
    img = image.astype(bf).reshape(B, H, W * 3)
    # pre-split even / odd rows, batch on the sublane axis -> the kernel only
    # issues contiguous unit-stride loads (no strided sublane access).
    even = jnp.transpose(img[:, 0:2 * hp + 1:2, :], (1, 0, 2))   # [hp+1, B, W*3]
    odd = jnp.transpose(img[:, 1:2 * hp + 1:2, :], (1, 0, 2))    # [hp,   B, W*3]
    extra = jnp.concatenate(
        [sr.astype(bf), direction.astype(bf)[:, None]], axis=1)  # [B, SR_size]
    if b_pad != B:
        pad = b_pad - B
        even = jnp.pad(even, ((0, 0), (0, pad), (0, 0)))
        odd = jnp.pad(odd, ((0, 0), (0, pad), (0, 0)))
        extra = jnp.pad(extra, ((0, pad), (0, 0)))

    weight_names = ("m1", "b1", "m2", "b2", "m3", "b3",
                    "w1i", "w1e", "bh1", "w2", "bh2")
    weights = [params[k] for k in weight_names]

    def _const_spec(arr):
        zeros = (0,) * arr.ndim
        return pl.BlockSpec(arr.shape, lambda i, _z=zeros: _z)

    kernel = functools.partial(_fused_forward_kernel, act_dim=act_dim,
                               hp=hp, h2=h2, h3=h3, half=half)

    # VMEM budget: double-buffered per-step blocks + weights, plus headroom.
    weight_bytes = sum(int(np.prod(w.shape)) * w.dtype.itemsize for w in weights)
    in_block_bytes = ((hp + 1) * bt * W * 3 + hp * bt * W * 3 + bt * e_dim) * 2
    out_block_bytes = bt * HEAD_W * 4
    vmem_bytes = int(2 * (in_block_bytes + out_block_bytes + weight_bytes)
                     + (8 << 20))

    flops = int(b_pad * (
        hp * 4 * 2 * (W * 3) * (2 * half)
        + h2 * 2 * 2 * half * (w2o * 32)
        + h3 * 2 * 2 * (w2o * 32) * row_w
        + 2 * (h3 * row_w + e_dim) * HEAD_W
        + 2 * HEAD_W * HEAD_W))
    cost = pl.CostEstimate(
        flops=flops,
        transcendentals=int(b_pad * (2 * HEAD_W + 1)),
        bytes_accessed=int(even.size * 2 + odd.size * 2 + extra.size * 2
                           + b_pad * HEAD_W * 4 + weight_bytes * n_steps))

    out = pl.pallas_call(
        kernel,
        grid=(n_steps,),
        in_specs=[pl.BlockSpec((hp + 1, bt, W * 3), lambda i: (0, i, 0)),
                  pl.BlockSpec((hp, bt, W * 3), lambda i: (0, i, 0)),
                  pl.BlockSpec((bt, e_dim), lambda i: (i, 0))]
                 + [_const_spec(w) for w in weights],
        out_specs=pl.BlockSpec((bt, HEAD_W), lambda i: (i, 0)),
        out_shape=jax.ShapeDtypeStruct((b_pad, HEAD_W), jnp.float32),
        compiler_params=pltpu.CompilerParams(
            dimension_semantics=("parallel",),      # batch across megacore TCs
            vmem_limit_bytes=min(vmem_bytes, 64 << 20)),
        cost_estimate=cost,
    )(even, odd, extra, *weights)

    log_probs = out[:B, :act_dim]
    value = out[:B, act_dim]
    return log_probs, value


# ----------------------------------------------------------------------------
# Plain-JAX reference of the same module (bf16 matmul operands / f32 accumulate
# exactly like the kernel, so the tolerance can be tight and meaningful).
# ----------------------------------------------------------------------------
_BF = jnp.bfloat16


def _ref_conv2x2_bf16(x_bf, w_f32, b_f32):
    w = w_f32.astype(_BF)
    ein = functools.partial(jnp.einsum, "bhwc,oc->bhwo",
                            preferred_element_type=jnp.float32)
    out = (ein(x_bf[:, :-1, :-1, :], w[:, :, 0, 0])
           + ein(x_bf[:, :-1, 1:, :], w[:, :, 0, 1])
           + ein(x_bf[:, 1:, :-1, :], w[:, :, 1, 0])
           + ein(x_bf[:, 1:, 1:, :], w[:, :, 1, 1]))
    return out + b_f32


def _ref_pool2x2(x):
    B, H, W, C = x.shape
    x = x[:, :2 * (H // 2), :2 * (W // 2), :]
    return x.reshape(B, H // 2, 2, W // 2, 2, C).max(axis=(2, 4))


def _ref_dot(a_bf, w_f32, b_f32):
    return (jnp.dot(a_bf, w_f32.astype(_BF),
                    preferred_element_type=jnp.float32) + b_f32)


def reference_forward(raw, image, sr, direction):
    x = image.astype(_BF)                                   # raw 0..255
    w1s = raw["c1_w"] * _INV255                             # /255 folded, like kernel
    x = jax.nn.relu(_ref_conv2x2_bf16(x, w1s, raw["c1_b"]))
    x = _ref_pool2x2(x)
    x = jax.nn.relu(_ref_conv2x2_bf16(x.astype(_BF), raw["c2_w"], raw["c2_b"]))
    x = jax.nn.relu(_ref_conv2x2_bf16(x.astype(_BF), raw["c3_w"], raw["c3_b"]))
    flat = x.reshape(x.shape[0], -1).astype(_BF)            # (y, x, c) order
    emb = jnp.concatenate(
        [flat, sr.astype(_BF), direction.astype(_BF)[:, None]], axis=1)
    ha = jnp.tanh(_ref_dot(emb, raw["a1_w"].T, raw["a1_b"]))
    logits = _ref_dot(ha.astype(_BF), raw["a2_w"].T, raw["a2_b"])
    log_probs = jax.nn.log_softmax(logits, axis=-1)
    hc = jnp.tanh(_ref_dot(emb, raw["v1_w"].T, raw["v1_b"]))
    value = _ref_dot(hc.astype(_BF), raw["v2_w"].T, raw["v2_b"])[:, 0]
    return log_probs, value


# ----------------------------------------------------------------------------
if __name__ == "__main__":
    key = jax.random.PRNGKey(0)
    k_param, k_img, k_sr, k_dir = jax.random.split(key, 4)

    # obs_space['image'] = (8, 8, 3), act_dim = 4, SR_single = 7.
    # forward's SR input has SR_single columns; direction supplies the extra
    # +1, so embedding width == image_embedding_size + SR_size (= 72).
    B, n, m = 32, 8, 8
    act_dim = 4
    sr_single = 7

    params, raw = build_params(k_param, n, m, act_dim, sr_single)

    image = jax.random.uniform(k_img, (B, n, m, 3), jnp.float32) * 255.0
    sr = jax.random.normal(k_sr, (B, sr_single), jnp.float32)
    direction = jax.random.randint(k_dir, (B,), 0, 4).astype(jnp.float32)

    # block_b=16 -> 2 grid steps of 16 samples each (exercises the pipeline).
    fwd = jax.jit(functools.partial(acmodel_sr_forward, act_dim=act_dim,
                                    block_b=16))
    log_probs, value = fwd(params, image, sr, direction)
    jax.block_until_ready((log_probs, value))

    assert log_probs.shape == (B, act_dim)
    assert value.shape == (B,)
    # Policy log-probs must normalize.
    assert np.allclose(np.exp(np.asarray(log_probs)).sum(axis=1), 1.0, atol=1e-3)

    # Cross-check against the plain-JAX reference.  Both paths use identical
    # bf16 matmul operands with f32 accumulation; the only remaining difference
    # is accumulation order, so 1e-2 is a tight-but-safe bound.
    ref_lp, ref_v = reference_forward(raw, image, sr, direction)
    np.testing.assert_allclose(np.asarray(log_probs), np.asarray(ref_lp),
                               rtol=1e-2, atol=1e-2)
    np.testing.assert_allclose(np.asarray(value), np.asarray(ref_v),
                               rtol=1e-2, atol=1e-2)

    print("KERNEL_OK")
</pallas_src>

<mosaic_0001>
module attributes {stable_mosaic.version = 11 : i64} {
  func.func @_fused_forward_kernel(%arg0: i32, %arg1: memref<4x16x24xbf16, #tpu.memory_space<vmem>>, %arg2: memref<3x16x24xbf16, #tpu.memory_space<vmem>>, %arg3: memref<16x8xbf16, #tpu.memory_space<vmem>>, %arg4: memref<2x24x96xbf16, #tpu.memory_space<vmem>>, %arg5: memref<1x48xf32, #tpu.memory_space<vmem>>, %arg6: memref<2x48x64xbf16, #tpu.memory_space<vmem>>, %arg7: memref<1x64xf32, #tpu.memory_space<vmem>>, %arg8: memref<2x64x64xbf16, #tpu.memory_space<vmem>>, %arg9: memref<1x64xf32, #tpu.memory_space<vmem>>, %arg10: memref<64x128xbf16, #tpu.memory_space<vmem>>, %arg11: memref<8x128xbf16, #tpu.memory_space<vmem>>, %arg12: memref<1x128xf32, #tpu.memory_space<vmem>>, %arg13: memref<128x128xbf16, #tpu.memory_space<vmem>>, %arg14: memref<1x128xf32, #tpu.memory_space<vmem>>, %arg15: memref<16x128xf32, #tpu.memory_space<vmem>>) attributes {dimension_semantics = [#tpu.dimension_semantics<parallel>], iteration_bounds = array<i64: 2>, scalar_prefetch = 0 : i64, scratch_operands = 0 : i64, tpu.core_type = #tpu.core_type<tc>, window_params = [{transform_indices = @transform_0, window_bounds = array<i64: 4, 16, 24>}, {transform_indices = @transform_1, window_bounds = array<i64: 3, 16, 24>}, {transform_indices = @transform_2, window_bounds = array<i64: 16, 8>}, {pipeline_mode = #tpu.pipeline_mode<synchronous>, transform_indices = @transform_3, window_bounds = array<i64: 2, 24, 96>}, {pipeline_mode = #tpu.pipeline_mode<synchronous>, transform_indices = @transform_4, window_bounds = array<i64: 1, 48>}, {pipeline_mode = #tpu.pipeline_mode<synchronous>, transform_indices = @transform_5, window_bounds = array<i64: 2, 48, 64>}, {pipeline_mode = #tpu.pipeline_mode<synchronous>, transform_indices = @transform_6, window_bounds = array<i64: 1, 64>}, {pipeline_mode = #tpu.pipeline_mode<synchronous>, transform_indices = @transform_7, window_bounds = array<i64: 2, 64, 64>}, {pipeline_mode = #tpu.pipeline_mode<synchronous>, transform_indices = @transform_8, window_bounds = array<i64: 1, 64>}, {pipeline_mode = #tpu.pipeline_mode<synchronous>, transform_indices = @transform_9, window_bounds = array<i64: 64, 128>}, {pipeline_mode = #tpu.pipeline_mode<synchronous>, transform_indices = @transform_10, window_bounds = array<i64: 8, 128>}, {pipeline_mode = #tpu.pipeline_mode<synchronous>, transform_indices = @transform_11, window_bounds = array<i64: 1, 128>}, {pipeline_mode = #tpu.pipeline_mode<synchronous>, transform_indices = @transform_12, window_bounds = array<i64: 128, 128>}, {pipeline_mode = #tpu.pipeline_mode<synchronous>, transform_indices = @transform_13, window_bounds = array<i64: 1, 128>}, {transform_indices = @transform_14, window_bounds = array<i64: 16, 128>}]} {
    %c0 = arith.constant 0 : index
    %c0_0 = arith.constant 0 : index
    %c0_1 = arith.constant 0 : index
    %0 = vector.load %arg4[%c0, %c0_0, %c0_1] : memref<2x24x96xbf16, #tpu.memory_space<vmem>>, vector<1x24x96xbf16>
    %1 = vector.shape_cast %0 : vector<1x24x96xbf16> to vector<24x96xbf16>
    %c1 = arith.constant 1 : index
    %c0_2 = arith.constant 0 : index
    %c0_3 = arith.constant 0 : index
    %2 = vector.load %arg4[%c1, %c0_2, %c0_3] : memref<2x24x96xbf16, #tpu.memory_space<vmem>>, vector<1x24x96xbf16>
    %3 = vector.shape_cast %2 : vector<1x24x96xbf16> to vector<24x96xbf16>
    %c0_4 = arith.constant 0 : index
    %c0_5 = arith.constant 0 : index
    %4 = vector.load %arg5[%c0_4, %c0_5] : memref<1x48xf32, #tpu.memory_space<vmem>>, vector<1x48xf32>
    %c0_6 = arith.constant 0 : index
    %c0_7 = arith.constant 0 : index
    %c0_8 = arith.constant 0 : index
    %5 = vector.load %arg6[%c0_6, %c0_7, %c0_8] : memref<2x48x64xbf16, #tpu.memory_space<vmem>>, vector<1x48x64xbf16>
    %6 = vector.shape_cast %5 : vector<1x48x64xbf16> to vector<48x64xbf16>
    %c1_9 = arith.constant 1 : index
    %c0_10 = arith.constant 0 : index
    %c0_11 = arith.constant 0 : index
    %7 = vector.load %arg6[%c1_9, %c0_10, %c0_11] : memref<2x48x64xbf16, #tpu.memory_space<vmem>>, vector<1x48x64xbf16>
    %8 = vector.shape_cast %7 : vector<1x48x64xbf16> to vector<48x64xbf16>
    %c0_12 = arith.constant 0 : index
    %c0_13 = arith.constant 0 : index
    %9 = vector.load %arg7[%c0_12, %c0_13] : memref<1x64xf32, #tpu.memory_space<vmem>>, vector<1x64xf32>
    %c0_14 = arith.constant 0 : index
    %c0_15 = arith.constant 0 : index
    %c0_16 = arith.constant 0 : index
    %10 = vector.load %arg8[%c0_14, %c0_15, %c0_16] : memref<2x64x64xbf16, #tpu.memory_space<vmem>>, vector<1x64x64xbf16>
    %11 = vector.shape_cast %10 : vector<1x64x64xbf16> to vector<64x64xbf16>
    %c1_17 = arith.constant 1 : index
    %c0_18 = arith.constant 0 : index
    %c0_19 = arith.constant 0 : index
    %12 = vector.load %arg8[%c1_17, %c0_18, %c0_19] : memref<2x64x64xbf16, #tpu.memory_space<vmem>>, vector<1x64x64xbf16>
    %13 = vector.shape_cast %12 : vector<1x64x64xbf16> to vector<64x64xbf16>
    %c0_20 = arith.constant 0 : index
    %c0_21 = arith.constant 0 : index
    %14 = vector.load %arg9[%c0_20, %c0_21] : memref<1x64xf32, #tpu.memory_space<vmem>>, vector<1x64xf32>
    %c0_22 = arith.constant 0 : index
    %c0_23 = arith.constant 0 : index
    %c0_24 = arith.constant 0 : index
    %15 = vector.load %arg1[%c0_22, %c0_23, %c0_24] : memref<4x16x24xbf16, #tpu.memory_space<vmem>>, vector<1x16x24xbf16>
    %16 = vector.shape_cast %15 : vector<1x16x24xbf16> to vector<16x24xbf16>
    %c0_25 = arith.constant 0 : index
    %c0_26 = arith.constant 0 : index
    %c0_27 = arith.constant 0 : index
    %17 = vector.load %arg2[%c0_25, %c0_26, %c0_27] : memref<3x16x24xbf16, #tpu.memory_space<vmem>>, vector<1x16x24xbf16>
    %18 = vector.shape_cast %17 : vector<1x16x24xbf16> to vector<16x24xbf16>
    %c1_28 = arith.constant 1 : index
    %c0_29 = arith.constant 0 : index
    %c0_30 = arith.constant 0 : index
    %19 = vector.load %arg1[%c1_28, %c0_29, %c0_30] : memref<4x16x24xbf16, #tpu.memory_space<vmem>>, vector<1x16x24xbf16>
    %20 = vector.shape_cast %19 : vector<1x16x24xbf16> to vector<16x24xbf16>
    %cst = arith.constant dense<0.000000e+00> : vector<16x96xf32>
    %21 = tpu.matmul %16, %1, %cst {dimension_numbers = #tpu.dot_dimension_numbers<[1], [0], [0], [1], [0, 0, 1, 1], [], []>} : vector<16x24xbf16>, vector<24x96xbf16>, vector<16x96xf32> -> vector<16x96xf32>
    %cst_31 = arith.constant dense<0.000000e+00> : vector<16x96xf32>
    %22 = tpu.matmul %18, %3, %cst_31 {dimension_numbers = #tpu.dot_dimension_numbers<[1], [0], [0], [1], [0, 0, 1, 1], [], []>} : vector<16x24xbf16>, vector<24x96xbf16>, vector<16x96xf32> -> vector<16x96xf32>
    %23 = arith.addf %21, %22 : vector<16x96xf32>
    %cst_32 = arith.constant dense<0.000000e+00> : vector<16x96xf32>
    %24 = tpu.matmul %18, %1, %cst_32 {dimension_numbers = #tpu.dot_dimension_numbers<[1], [0], [0], [1], [0, 0, 1, 1], [], []>} : vector<16x24xbf16>, vector<24x96xbf16>, vector<16x96xf32> -> vector<16x96xf32>
    %cst_33 = arith.constant dense<0.000000e+00> : vector<16x96xf32>
    %25 = tpu.matmul %20, %3, %cst_33 {dimension_numbers = #tpu.dot_dimension_numbers<[1], [0], [0], [1], [0, 0, 1, 1], [], []>} : vector<16x24xbf16>, vector<24x96xbf16>, vector<16x96xf32> -> vector<16x96xf32>
    %26 = arith.addf %24, %25 : vector<16x96xf32>
    %27 = arith.maximumf %23, %26 : vector<16x96xf32>
    %28 = vector.extract_strided_slice %27 {offsets = [0, 0], sizes = [16, 48], strides = [1, 1]} : vector<16x96xf32> to vector<16x48xf32>
    %29 = vector.extract_strided_slice %27 {offsets = [0, 48], sizes = [16, 48], strides = [1, 1]} : vector<16x96xf32> to vector<16x48xf32>
    %30 = arith.maximumf %28, %29 : vector<16x48xf32>
    %31 = vector.broadcast %4 : vector<1x48xf32> to vector<16x48xf32>
    %32 = arith.addf %30, %31 : vector<16x48xf32>
    %cst_34 = arith.constant 0.000000e+00 : f32
    %33 = vector.broadcast %cst_34 : f32 to vector<16x48xf32>
    %34 = arith.maximumf %32, %33 : vector<16x48xf32>
    %35 = arith.truncf %34 : vector<16x48xf32> to vector<16x48xbf16>
    %c1_35 = arith.constant 1 : index
    %c0_36 = arith.constant 0 : index
    %c0_37 = arith.constant 0 : index
    %36 = vector.load %arg1[%c1_35, %c0_36, %c0_37] : memref<4x16x24xbf16, #tpu.memory_space<vmem>>, vector<1x16x24xbf16>
    %37 = vector.shape_cast %36 : vector<1x16x24xbf16> to vector<16x24xbf16>
    %c1_38 = arith.constant 1 : index
    %c0_39 = arith.constant 0 : index
    %c0_40 = arith.constant 0 : index
    %38 = vector.load %arg2[%c1_38, %c0_39, %c0_40] : memref<3x16x24xbf16, #tpu.memory_space<vmem>>, vector<1x16x24xbf16>
    %39 = vector.shape_cast %38 : vector<1x16x24xbf16> to vector<16x24xbf16>
    %c2 = arith.constant 2 : index
    %c0_41 = arith.constant 0 : index
    %c0_42 = arith.constant 0 : index
    %40 = vector.load %arg1[%c2, %c0_41, %c0_42] : memref<4x16x24xbf16, #tpu.memory_space<vmem>>, vector<1x16x24xbf16>
    %41 = vector.shape_cast %40 : vector<1x16x24xbf16> to vector<16x24xbf16>
    %cst_43 = arith.constant dense<0.000000e+00> : vector<16x96xf32>
    %42 = tpu.matmul %37, %1, %cst_43 {dimension_numbers = #tpu.dot_dimension_numbers<[1], [0], [0], [1], [0, 0, 1, 1], [], []>} : vector<16x24xbf16>, vector<24x96xbf16>, vector<16x96xf32> -> vector<16x96xf32>
    %cst_44 = arith.constant dense<0.000000e+00> : vector<16x96xf32>
    %43 = tpu.matmul %39, %3, %cst_44 {dimension_numbers = #tpu.dot_dimension_numbers<[1], [0], [0], [1], [0, 0, 1, 1], [], []>} : vector<16x24xbf16>, vector<24x96xbf16>, vector<16x96xf32> -> vector<16x96xf32>
    %44 = arith.addf %42, %43 : vector<16x96xf32>
    %cst_45 = arith.constant dense<0.000000e+00> : vector<16x96xf32>
    %45 = tpu.matmul %39, %1, %cst_45 {dimension_numbers = #tpu.dot_dimension_numbers<[1], [0], [0], [1], [0, 0, 1, 1], [], []>} : vector<16x24xbf16>, vector<24x96xbf16>, vector<16x96xf32> -> vector<16x96xf32>
    %cst_46 = arith.constant dense<0.000000e+00> : vector<16x96xf32>
    %46 = tpu.matmul %41, %3, %cst_46 {dimension_numbers = #tpu.dot_dimension_numbers<[1], [0], [0], [1], [0, 0, 1, 1], [], []>} : vector<16x24xbf16>, vector<24x96xbf16>, vector<16x96xf32> -> vector<16x96xf32>
    %47 = arith.addf %45, %46 : vector<16x96xf32>
    %48 = arith.maximumf %44, %47 : vector<16x96xf32>
    %49 = vector.extract_strided_slice %48 {offsets = [0, 0], sizes = [16, 48], strides = [1, 1]} : vector<16x96xf32> to vector<16x48xf32>
    %50 = vector.extract_strided_slice %48 {offsets = [0, 48], sizes = [16, 48], strides = [1, 1]} : vector<16x96xf32> to vector<16x48xf32>
    %51 = arith.maximumf %49, %50 : vector<16x48xf32>
    %52 = vector.broadcast %4 : vector<1x48xf32> to vector<16x48xf32>
    %53 = arith.addf %51, %52 : vector<16x48xf32>
    %cst_47 = arith.constant 0.000000e+00 : f32
    %54 = vector.broadcast %cst_47 : f32 to vector<16x48xf32>
    %55 = arith.maximumf %53, %54 : vector<16x48xf32>
    %56 = arith.truncf %55 : vector<16x48xf32> to vector<16x48xbf16>
    %c2_48 = arith.constant 2 : index
    %c0_49 = arith.constant 0 : index
    %c0_50 = arith.constant 0 : index
    %57 = vector.load %arg1[%c2_48, %c0_49, %c0_50] : memref<4x16x24xbf16, #tpu.memory_space<vmem>>, vector<1x16x24xbf16>
    %58 = vector.shape_cast %57 : vector<1x16x24xbf16> to vector<16x24xbf16>
    %c2_51 = arith.constant 2 : index
    %c0_52 = arith.constant 0 : index
    %c0_53 = arith.constant 0 : index
    %59 = vector.load %arg2[%c2_51, %c0_52, %c0_53] : memref<3x16x24xbf16, #tpu.memory_space<vmem>>, vector<1x16x24xbf16>
    %60 = vector.shape_cast %59 : vector<1x16x24xbf16> to vector<16x24xbf16>
    %c3 = arith.constant 3 : index
    %c0_54 = arith.constant 0 : index
    %c0_55 = arith.constant 0 : index
    %61 = vector.load %arg1[%c3, %c0_54, %c0_55] : memref<4x16x24xbf16, #tpu.memory_space<vmem>>, vector<1x16x24xbf16>
    %62 = vector.shape_cast %61 : vector<1x16x24xbf16> to vector<16x24xbf16>
    %cst_56 = arith.constant dense<0.000000e+00> : vector<16x96xf32>
    %63 = tpu.matmul %58, %1, %cst_56 {dimension_numbers = #tpu.dot_dimension_numbers<[1], [0], [0], [1], [0, 0, 1, 1], [], []>} : vector<16x24xbf16>, vector<24x96xbf16>, vector<16x96xf32> -> vector<16x96xf32>
    %cst_57 = arith.constant dense<0.000000e+00> : vector<16x96xf32>
    %64 = tpu.matmul %60, %3, %cst_57 {dimension_numbers = #tpu.dot_dimension_numbers<[1], [0], [0], [1], [0, 0, 1, 1], [], []>} : vector<16x24xbf16>, vector<24x96xbf16>, vector<16x96xf32> -> vector<16x96xf32>
    %65 = arith.addf %63, %64 : vector<16x96xf32>
    %cst_58 = arith.constant dense<0.000000e+00> : vector<16x96xf32>
    %66 = tpu.matmul %60, %1, %cst_58 {dimension_numbers = #tpu.dot_dimension_numbers<[1], [0], [0], [1], [0, 0, 1, 1], [], []>} : vector<16x24xbf16>, vector<24x96xbf16>, vector<16x96xf32> -> vector<16x96xf32>
    %cst_59 = arith.constant dense<0.000000e+00> : vector<16x96xf32>
    %67 = tpu.matmul %62, %3, %cst_59 {dimension_numbers = #tpu.dot_dimension_numbers<[1], [0], [0], [1], [0, 0, 1, 1], [], []>} : vector<16x24xbf16>, vector<24x96xbf16>, vector<16x96xf32> -> vector<16x96xf32>
    %68 = arith.addf %66, %67 : vector<16x96xf32>
    %69 = arith.maximumf %65, %68 : vector<16x96xf32>
    %70 = vector.extract_strided_slice %69 {offsets = [0, 0], sizes = [16, 48], strides = [1, 1]} : vector<16x96xf32> to vector<16x48xf32>
    %71 = vector.extract_strided_slice %69 {offsets = [0, 48], sizes = [16, 48], strides = [1, 1]} : vector<16x96xf32> to vector<16x48xf32>
    %72 = arith.maximumf %70, %71 : vector<16x48xf32>
    %73 = vector.broadcast %4 : vector<1x48xf32> to vector<16x48xf32>
    %74 = arith.addf %72, %73 : vector<16x48xf32>
    %cst_60 = arith.constant 0.000000e+00 : f32
    %75 = vector.broadcast %cst_60 : f32 to vector<16x48xf32>
    %76 = arith.maximumf %74, %75 : vector<16x48xf32>
    %77 = arith.truncf %76 : vector<16x48xf32> to vector<16x48xbf16>
    %cst_61 = arith.constant dense<0.000000e+00> : vector<16x64xf32>
    %78 = tpu.matmul %35, %6, %cst_61 {dimension_numbers = #tpu.dot_dimension_numbers<[1], [0], [0], [1], [0, 0, 1, 1], [], []>} : vector<16x48xbf16>, vector<48x64xbf16>, vector<16x64xf32> -> vector<16x64xf32>
    %cst_62 = arith.constant dense<0.000000e+00> : vector<16x64xf32>
    %79 = tpu.matmul %56, %8, %cst_62 {dimension_numbers = #tpu.dot_dimension_numbers<[1], [0], [0], [1], [0, 0, 1, 1], [], []>} : vector<16x48xbf16>, vector<48x64xbf16>, vector<16x64xf32> -> vector<16x64xf32>
    %80 = arith.addf %78, %79 : vector<16x64xf32>
    %81 = vector.broadcast %9 : vector<1x64xf32> to vector<16x64xf32>
    %82 = arith.addf %80, %81 : vector<16x64xf32>
    %cst_63 = arith.constant 0.000000e+00 : f32
    %83 = vector.broadcast %cst_63 : f32 to vector<16x64xf32>
    %84 = arith.maximumf %82, %83 : vector<16x64xf32>
    %85 = arith.truncf %84 : vector<16x64xf32> to vector<16x64xbf16>
    %cst_64 = arith.constant dense<0.000000e+00> : vector<16x64xf32>
    %86 = tpu.matmul %56, %6, %cst_64 {dimension_numbers = #tpu.dot_dimension_numbers<[1], [0], [0], [1], [0, 0, 1, 1], [], []>} : vector<16x48xbf16>, vector<48x64xbf16>, vector<16x64xf32> -> vector<16x64xf32>
    %cst_65 = arith.constant dense<0.000000e+00> : vector<16x64xf32>
    %87 = tpu.matmul %77, %8, %cst_65 {dimension_numbers = #tpu.dot_dimension_numbers<[1], [0], [0], [1], [0, 0, 1, 1], [], []>} : vector<16x48xbf16>, vector<48x64xbf16>, vector<16x64xf32> -> vector<16x64xf32>
    %88 = arith.addf %86, %87 : vector<16x64xf32>
    %89 = vector.broadcast %9 : vector<1x64xf32> to vector<16x64xf32>
    %90 = arith.addf %88, %89 : vector<16x64xf32>
    %cst_66 = arith.constant 0.000000e+00 : f32
    %91 = vector.broadcast %cst_66 : f32 to vector<16x64xf32>
    %92 = arith.maximumf %90, %91 : vector<16x64xf32>
    %93 = arith.truncf %92 : vector<16x64xf32> to vector<16x64xbf16>
    %cst_67 = arith.constant dense<0.000000e+00> : vector<16x64xf32>
    %94 = tpu.matmul %85, %11, %cst_67 {dimension_numbers = #tpu.dot_dimension_numbers<[1], [0], [0], [1], [0, 0, 1, 1], [], []>} : vector<16x64xbf16>, vector<64x64xbf16>, vector<16x64xf32> -> vector<16x64xf32>
    %cst_68 = arith.constant dense<0.000000e+00> : vector<16x64xf32>
    %95 = tpu.matmul %93, %13, %cst_68 {dimension_numbers = #tpu.dot_dimension_numbers<[1], [0], [0], [1], [0, 0, 1, 1], [], []>} : vector<16x64xbf16>, vector<64x64xbf16>, vector<16x64xf32> -> vector<16x64xf32>
    %96 = arith.addf %94, %95 : vector<16x64xf32>
    %97 = vector.broadcast %14 : vector<1x64xf32> to vector<16x64xf32>
    %98 = arith.addf %96, %97 : vector<16x64xf32>
    %cst_69 = arith.constant 0.000000e+00 : f32
    %99 = vector.broadcast %cst_69 : f32 to vector<16x64xf32>
    %100 = arith.maximumf %98, %99 : vector<16x64xf32>
    %101 = arith.truncf %100 : vector<16x64xf32> to vector<16x64xbf16>
    %c0_70 = arith.constant 0 : index
    %c0_71 = arith.constant 0 : index
    %102 = vector.load %arg10[%c0_70, %c0_71] : memref<64x128xbf16, #tpu.memory_space<vmem>>, vector<64x128xbf16>
    %cst_72 = arith.constant dense<0.000000e+00> : vector<16x128xf32>
    %103 = tpu.matmul %101, %102, %cst_72 {dimension_numbers = #tpu.dot_dimension_numbers<[1], [0], [0], [1], [0, 0, 1, 1], [], []>} : vector<16x64xbf16>, vector<64x128xbf16>, vector<16x128xf32> -> vector<16x128xf32>
    %c0_73 = arith.constant 0 : index
    %c0_74 = arith.constant 0 : index
    %104 = vector.load %arg3[%c0_73, %c0_74] : memref<16x8xbf16, #tpu.memory_space<vmem>>, vector<16x8xbf16>
    %c0_75 = arith.constant 0 : index
    %c0_76 = arith.constant 0 : index
    %105 = vector.load %arg11[%c0_75, %c0_76] : memref<8x128xbf16, #tpu.memory_space<vmem>>, vector<8x128xbf16>
    %cst_77 = arith.constant dense<0.000000e+00> : vector<16x128xf32>
    %106 = tpu.matmul %104, %105, %cst_77 {dimension_numbers = #tpu.dot_dimension_numbers<[1], [0], [0], [1], [0, 0, 1, 1], [], []>} : vector<16x8xbf16>, vector<8x128xbf16>, vector<16x128xf32> -> vector<16x128xf32>
    %107 = arith.addf %103, %106 : vector<16x128xf32>
    %c0_78 = arith.constant 0 : index
    %c0_79 = arith.constant 0 : index
    %108 = vector.load %arg12[%c0_78, %c0_79] : memref<1x128xf32, #tpu.memory_space<vmem>>, vector<1x128xf32>
    %109 = vector.broadcast %108 : vector<1x128xf32> to vector<16x128xf32>
    %110 = arith.addf %107, %109 : vector<16x128xf32>
    %111 = math.tanh %110 : vector<16x128xf32>
    %112 = arith.truncf %111 : vector<16x128xf32> to vector<16x128xbf16>
    %c0_80 = arith.constant 0 : index
    %c0_81 = arith.constant 0 : index
    %113 = vector.load %arg13[%c0_80, %c0_81] : memref<128x128xbf16, #tpu.memory_space<vmem>>, vector<128x128xbf16>
    %cst_82 = arith.constant dense<0.000000e+00> : vector<16x128xf32>
    %114 = tpu.matmul %112, %113, %cst_82 {dimension_numbers = #tpu.dot_dimension_numbers<[1], [0], [0], [1], [0, 0, 1, 1], [], []>} : vector<16x128xbf16>, vector<128x128xbf16>, vector<16x128xf32> -> vector<16x128xf32>
    %c0_83 = arith.constant 0 : index
    %c0_84 = arith.constant 0 : index
    %115 = vector.load %arg14[%c0_83, %c0_84] : memref<1x128xf32, #tpu.memory_space<vmem>>, vector<1x128xf32>
    %116 = vector.broadcast %115 : vector<1x128xf32> to vector<16x128xf32>
    %117 = arith.addf %114, %116 : vector<16x128xf32>
    %118 = tpu.iota {dimensions = array<i32: 1>} : vector<16x128xi32>
    %c4_i32 = arith.constant 4 : i32
    %119 = vector.broadcast %c4_i32 : i32 to vector<16x128xi32>
    %120 = arith.cmpi slt, %118, %119 : vector<16x128xi32>
    %cst_85 = arith.constant -1.000000e+30 : f32
    %121 = vector.broadcast %cst_85 : f32 to vector<16x128xf32>
    %122 = arith.select %120, %117, %121 : vector<16x128xi1>, vector<16x128xf32>
    %cst_86 = arith.constant dense<0xFF800000> : vector<16xf32>
    %123 = vector.multi_reduction <maximumf>, %122, %cst_86 [1] : vector<16x128xf32> to vector<16xf32>
    %124 = vector.shape_cast %123 : vector<16xf32> to vector<16x1xf32>
    %125 = vector.broadcast %124 : vector<16x1xf32> to vector<16x128xf32>
    %126 = arith.subf %117, %125 : vector<16x128xf32>
    %127 = math.exp %126 : vector<16x128xf32>
    %cst_87 = arith.constant 0.000000e+00 : f32
    %128 = vector.broadcast %cst_87 : f32 to vector<16x128xf32>
    %129 = arith.select %120, %127, %128 : vector<16x128xi1>, vector<16x128xf32>
    %cst_88 = arith.constant dense<0.000000e+00> : vector<16xf32>
    %130 = vector.multi_reduction <add>, %129, %cst_88 [1] : vector<16x128xf32> to vector<16xf32>
    %131 = vector.shape_cast %130 : vector<16xf32> to vector<16x1xf32>
    %132 = math.log %131 : vector<16x1xf32>
    %133 = vector.broadcast %124 : vector<16x1xf32> to vector<16x128xf32>
    %134 = arith.subf %117, %133 : vector<16x128xf32>
    %135 = vector.broadcast %132 : vector<16x1xf32> to vector<16x128xf32>
    %136 = arith.subf %134, %135 : vector<16x128xf32>
    %c4_i32_89 = arith.constant 4 : i32
    %137 = vector.broadcast %c4_i32_89 : i32 to vector<16x128xi32>
    %138 = arith.cmpi eq, %118, %137 : vector<16x128xi32>
    %cst_90 = arith.constant 0.000000e+00 : f32
    %139 = vector.broadcast %cst_90 : f32 to vector<16x128xf32>
    %140 = arith.select %138, %117, %139 : vector<16x128xi1>, vector<16x128xf32>
    %141 = arith.select %120, %136, %140 : vector<16x128xi1>, vector<16x128xf32>
    %c0_91 = arith.constant 0 : index
    %c0_92 = arith.constant 0 : index
    %142 = vector.load %arg15[%c0_91, %c0_92] : memref<16x128xf32, #tpu.memory_space<vmem>>, vector<16x128xf32>
    tpu.vector_store %arg15[%c0_91, %c0_92], %141 {strides = array<i32>} : memref<16x128xf32, #tpu.memory_space<vmem>>, vector<16x128xf32>,
    return
  }
  func.func @transform_0(%arg0: i32) -> (i32, i32, i32) {
    %c0_i32 = arith.constant 0 : i32
    %c0_i32_0 = arith.constant 0 : i32
    %c0_i32_1 = arith.constant 0 : i32
    return %c0_i32, %arg0, %c0_i32_0 : i32, i32, i32
  }
  func.func @transform_1(%arg0: i32) -> (i32, i32, i32) {
    %c0_i32 = arith.constant 0 : i32
    %c0_i32_0 = arith.constant 0 : i32
    %c0_i32_1 = arith.constant 0 : i32
    return %c0_i32, %arg0, %c0_i32_0 : i32, i32, i32
  }
  func.func @transform_2(%arg0: i32) -> (i32, i32) {
    %c0_i32 = arith.constant 0 : i32
    %c0_i32_0 = arith.constant 0 : i32
    return %arg0, %c0_i32 : i32, i32
  }
  func.func @transform_3(%arg0: i32) -> (i32, i32, i32) {
    %c0_i32 = arith.constant 0 : i32
    %c0_i32_0 = arith.constant 0 : i32
    %c0_i32_1 = arith.constant 0 : i32
    %c0_i32_2 = arith.constant 0 : i32
    return %c0_i32, %c0_i32_0, %c0_i32_1 : i32, i32, i32
  }
  func.func @transform_4(%arg0: i32) -> (i32, i32) {
    %c0_i32 = arith.constant 0 : i32
    %c0_i32_0 = arith.constant 0 : i32
    %c0_i32_1 = arith.constant 0 : i32
    return %c0_i32, %c0_i32_0 : i32, i32
  }
  func.func @transform_5(%arg0: i32) -> (i32, i32, i32) {
    %c0_i32 = arith.constant 0 : i32
    %c0_i32_0 = arith.constant 0 : i32
    %c0_i32_1 = arith.constant 0 : i32
    %c0_i32_2 = arith.constant 0 : i32
    return %c0_i32, %c0_i32_0, %c0_i32_1 : i32, i32, i32
  }
  func.func @transform_6(%arg0: i32) -> (i32, i32) {
    %c0_i32 = arith.constant 0 : i32
    %c0_i32_0 = arith.constant 0 : i32
    %c0_i32_1 = arith.constant 0 : i32
    return %c0_i32, %c0_i32_0 : i32, i32
  }
  func.func @transform_7(%arg0: i32) -> (i32, i32, i32) {
    %c0_i32 = arith.constant 0 : i32
    %c0_i32_0 = arith.constant 0 : i32
    %c0_i32_1 = arith.constant 0 : i32
    %c0_i32_2 = arith.constant 0 : i32
    return %c0_i32, %c0_i32_0, %c0_i32_1 : i32, i32, i32
  }
  func.func @transform_8(%arg0: i32) -> (i32, i32) {
    %c0_i32 = arith.constant 0 : i32
    %c0_i32_0 = arith.constant 0 : i32
    %c0_i32_1 = arith.constant 0 : i32
    return %c0_i32, %c0_i32_0 : i32, i32
  }
  func.func @transform_9(%arg0: i32) -> (i32, i32) {
    %c0_i32 = arith.constant 0 : i32
    %c0_i32_0 = arith.constant 0 : i32
    %c0_i32_1 = arith.constant 0 : i32
    return %c0_i32, %c0_i32_0 : i32, i32
  }
  func.func @transform_10(%arg0: i32) -> (i32, i32) {
    %c0_i32 = arith.constant 0 : i32
    %c0_i32_0 = arith.constant 0 : i32
    %c0_i32_1 = arith.constant 0 : i32
    return %c0_i32, %c0_i32_0 : i32, i32
  }
  func.func @transform_11(%arg0: i32) -> (i32, i32) {
    %c0_i32 = arith.constant 0 : i32
    %c0_i32_0 = arith.constant 0 : i32
    %c0_i32_1 = arith.constant 0 : i32
    return %c0_i32, %c0_i32_0 : i32, i32
  }
  func.func @transform_12(%arg0: i32) -> (i32, i32) {
    %c0_i32 = arith.constant 0 : i32
    %c0_i32_0 = arith.constant 0 : i32
    %c0_i32_1 = arith.constant 0 : i32
    return %c0_i32, %c0_i32_0 : i32, i32
  }
  func.func @transform_13(%arg0: i32) -> (i32, i32) {
    %c0_i32 = arith.constant 0 : i32
    %c0_i32_0 = arith.constant 0 : i32
    %c0_i32_1 = arith.constant 0 : i32
    return %c0_i32, %c0_i32_0 : i32, i32
  }
  func.func @transform_14(%arg0: i32) -> (i32, i32) {
    %c0_i32 = arith.constant 0 : i32
    %c0_i32_0 = arith.constant 0 : i32
    return %arg0, %c0_i32 : i32, i32
  }
}

</mosaic_0001>

<llo_original>
// kernel: acmodel_sr_forward.1
$region0: #{acmodel_sr_forward.1}
  #allocation0 [shape = 'u32[]', space=smem, size = 0x4, offset = 0x4, fixed_abs, tag = 'smem constant byte address 0x4 - core index']
  #allocation1 [shape = 'u32[144,128]{1,0:T(1,128)}', space=vmem, size = 0x12000, scoped, tag = 'internal scratch']
  %s0 = inlined_call_operand.vmem [shape: bf16[4,32,24], index: 0, kind: input, shape index: {}]
  %s1 = inlined_call_operand.vmem [shape: bf16[3,32,24], index: 1, kind: input, shape index: {}]
  %s2 = inlined_call_operand.vmem [shape: bf16[32,8], index: 2, kind: input, shape index: {}]
  %s3 = inlined_call_operand.vmem [shape: bf16[2,24,96], index: 3, kind: input, shape index: {}]
  %s4 = inlined_call_operand.vmem [shape: f32[1,48], index: 4, kind: input, shape index: {}]
  %s5 = inlined_call_operand.vmem [shape: bf16[2,48,64], index: 5, kind: input, shape index: {}]
  %s6 = inlined_call_operand.vmem [shape: f32[1,64], index: 6, kind: input, shape index: {}]
  %s7 = inlined_call_operand.vmem [shape: bf16[2,64,64], index: 7, kind: input, shape index: {}]
  %s8 = inlined_call_operand.vmem [shape: f32[1,64], index: 8, kind: input, shape index: {}]
  %s9 = inlined_call_operand.vmem [shape: bf16[64,128], index: 9, kind: input, shape index: {}]
  %s10 = inlined_call_operand.vmem [shape: bf16[8,128], index: 10, kind: input, shape index: {}]
  %s11 = inlined_call_operand.vmem [shape: f32[1,128], index: 11, kind: input, shape index: {}]
  %s12 = inlined_call_operand.vmem [shape: bf16[128,128], index: 12, kind: input, shape index: {}]
  %s13 = inlined_call_operand.vmem [shape: f32[1,128], index: 13, kind: input, shape index: {}]
  %s14 = inlined_call_operand.vmem [shape: f32[32,128], index: 14, kind: output, shape index: {}]
  %s15 = sld [smem:[#allocation0]]
  $region171: #{acmodel_sr_forward.1} parent=0
    _
  %s17 = ssub.s32 1, %s15
  %s18 = scalar_select 0, %s17, %s15
  $region1: #{acmodel_sr_forward.1} parent=0
    #allocation2 [shape = 'u8[32768]{0}', space=vmem, size = 0x8000, scoped, tag = 'input window, operand 0']
    #allocation3 [shape = 'u8[24576]{0}', space=vmem, size = 0x6000, scoped, tag = 'input window, operand 1']
    loop: start=0, step=1, limit=4
    $region2: #{acmodel_sr_forward.1} parent=1 // loop_pre_header
      _
    $region3: #{acmodel_sr_forward.1} parent=1 // loop_header
      %s20 = sphi 0, %s24
      %p21 = scmp.ge.s32.totalorder %s20, 4
      %s30 = sphi 0, %s32
      %s33 = sphi 0, %s30
      %s34 = sphi 0, %s33
      %s50 = sphi 0, %s34
      %s56 = sphi 0, %s58
      %s59 = sphi 0, %s56
      %s60 = sphi 0, %s59
      %s76 = sphi 0, %s60
      %s82 = sphi 0, %s84
      %s85 = sphi 0, %s82
      %s86 = sphi 0, %s85
      %s102 = sphi 0, %s86
      %s106 = sphi 0, %s106
      %s108 = sphi 0, %s106
      %s109 = sphi 0, %s108
      %s123 = sphi 0, %s109
      %s127 = sphi 0, %s127
      %s129 = sphi 0, %s127
      %s130 = sphi 0, %s129
      %s144 = sphi 0, %s130
      %s148 = sphi 0, %s148
      %s150 = sphi 0, %s148
      %s151 = sphi 0, %s150
      %s165 = sphi 0, %s151
      %s169 = sphi 0, %s169
      %s171 = sphi 0, %s169
      %s172 = sphi 0, %s171
      %s186 = sphi 0, %s172
      %s190 = sphi 0, %s190
      %s192 = sphi 0, %s190
      %s193 = sphi 0, %s192
      %s207 = sphi 0, %s193
      %s211 = sphi 0, %s211
      %s213 = sphi 0, %s211
      %s214 = sphi 0, %s213
      %s228 = sphi 0, %s214
      %s232 = sphi 0, %s232
      %s234 = sphi 0, %s232
      %s235 = sphi 0, %s234
      %s249 = sphi 0, %s235
      %s253 = sphi 0, %s253
      %s255 = sphi 0, %s253
      %s256 = sphi 0, %s255
      %s270 = sphi 0, %s256
      %s274 = sphi 0, %s274
      %s276 = sphi 0, %s274
      %s277 = sphi 0, %s276
      %s291 = sphi 0, %s277
      %s295 = sphi 0, %s295
      %s297 = sphi 0, %s295
      %s298 = sphi 0, %s297
      %s312 = sphi 0, %s298
      %s316 = sphi 0, %s316
      %s318 = sphi 0, %s316
      %s319 = sphi 0, %s318
      %s333 = sphi 0, %s319
      %s339 = sphi 0, %s341
      %s342 = sphi 0, %s339
      %s343 = sphi 0, %s342
      %s359 = sphi 0, %s343
    $region4: #{acmodel_sr_forward.1} parent=1 // loop_header_branch
      %23 = sbr.rel (%p21) target = $region8
    $region5: #{acmodel_sr_forward.1} parent=1 // loop_body
      %s25 = ssub.s32 %s20, 1
      %s26 = ssub.s32 %s20, 2
      %s27 = sadd.s32 %s20, 1
      %s28 = ssub.s32 %s20, %s27
      %p29 = scmp.eq.s32.totalorder %s28, 0
      %s31 = sadd.s32 %s30, 1
      %s32 = scalar_select %p29, %s30, %s31
      %p35 = pneg %p29
      %p36 = scmp.eq.s32.totalorder %s20, 1
      %p37 = por %p35, %p36
      %p38 = scmp.ne.s32.totalorder %s30, %s33
      %p39 = scmp.eq.s32.totalorder %s20, 0
      %p40 = por %p38, %p39
      %p41 = scmp.ne.s32.totalorder %s30, %s33
      %p42 = scmp.eq.s32.totalorder %s25, 1
      %p43 = por %p41, %p42
      %p44 = scmp.ne.s32.totalorder %s33, %s34
      %p45 = scmp.eq.s32.totalorder %s25, 0
      %p46 = por %p44, %p45
      %p47 = scmp.ne.s32.totalorder %s33, %s34
      %p48 = scmp.eq.s32.totalorder %s26, 1
      %p49 = por %p47, %p48
      %p51 = scmp.ne.s32.totalorder %s34, %s50
      %p52 = scmp.eq.s32.totalorder %s26, 0
      %p53 = por %p51, %p52
      %s54 = ssub.s32 %s20, %s27
      %p55 = scmp.eq.s32.totalorder %s54, 0
      %s57 = sadd.s32 %s56, 1
      %s58 = scalar_select %p55, %s56, %s57
      %p61 = pneg %p55
      %p62 = scmp.eq.s32.totalorder %s20, 1
      %p63 = por %p61, %p62
      %p64 = scmp.ne.s32.totalorder %s56, %s59
      %p65 = scmp.eq.s32.totalorder %s20, 0
      %p66 = por %p64, %p65
      %p67 = scmp.ne.s32.totalorder %s56, %s59
      %p68 = scmp.eq.s32.totalorder %s25, 1
      %p69 = por %p67, %p68
      %p70 = scmp.ne.s32.totalorder %s59, %s60
      %p71 = scmp.eq.s32.totalorder %s25, 0
      %p72 = por %p70, %p71
      %p73 = scmp.ne.s32.totalorder %s59, %s60
      %p74 = scmp.eq.s32.totalorder %s26, 1
      %p75 = por %p73, %p74
      %p77 = scmp.ne.s32.totalorder %s60, %s76
      %p78 = scmp.eq.s32.totalorder %s26, 0
      %p79 = por %p77, %p78
      %s80 = ssub.s32 %s20, %s27
      %p81 = scmp.eq.s32.totalorder %s80, 0
      %s83 = sadd.s32 %s82, 1
      %s84 = scalar_select %p81, %s82, %s83
      %p87 = pneg %p81
      %p88 = scmp.eq.s32.totalorder %s20, 1
      %p89 = por %p87, %p88
      %p90 = scmp.ne.s32.totalorder %s82, %s85
      %p91 = scmp.eq.s32.totalorder %s20, 0
      %p92 = por %p90, %p91
      %p93 = scmp.ne.s32.totalorder %s82, %s85
      %p94 = scmp.eq.s32.totalorder %s25, 1
      %p95 = por %p93, %p94
      %p96 = scmp.ne.s32.totalorder %s85, %s86
      %p97 = scmp.eq.s32.totalorder %s25, 0
      %p98 = por %p96, %p97
      %p99 = scmp.ne.s32.totalorder %s85, %s86
      %p100 = scmp.eq.s32.totalorder %s26, 1
      %p101 = por %p99, %p100
      %p103 = scmp.ne.s32.totalorder %s86, %s102
      %p104 = scmp.eq.s32.totalorder %s26, 0
      %p105 = por %p103, %p104
      %s107 = sadd.s32 %s106, 1
      %p110 = scmp.eq.s32.totalorder %s20, 1
      %p111 = scmp.ne.s32.totalorder %s106, %s108
      %p112 = scmp.eq.s32.totalorder %s20, 0
      %p113 = por %p111, %p112
      %p114 = scmp.ne.s32.totalorder %s106, %s108
      %p115 = scmp.eq.s32.totalorder %s25, 1
      %p116 = por %p114, %p115
      %p117 = scmp.ne.s32.totalorder %s108, %s109
      %p118 = scmp.eq.s32.totalorder %s25, 0
      %p119 = por %p117, %p118
      %p120 = scmp.ne.s32.totalorder %s108, %s109
      %p121 = scmp.eq.s32.totalorder %s26, 1
      %p122 = por %p120, %p121
      %p124 = scmp.ne.s32.totalorder %s109, %s123
      %p125 = scmp.eq.s32.totalorder %s26, 0
      %p126 = por %p124, %p125
      %s128 = sadd.s32 %s127, 1
      %p131 = scmp.eq.s32.totalorder %s20, 1
      %p132 = scmp.ne.s32.totalorder %s127, %s129
      %p133 = scmp.eq.s32.totalorder %s20, 0
      %p134 = por %p132, %p133
      %p135 = scmp.ne.s32.totalorder %s127, %s129
      %p136 = scmp.eq.s32.totalorder %s25, 1
      %p137 = por %p135, %p136
      %p138 = scmp.ne.s32.totalorder %s129, %s130
      %p139 = scmp.eq.s32.totalorder %s25, 0
      %p140 = por %p138, %p139
      %p141 = scmp.ne.s32.totalorder %s129, %s130
      %p142 = scmp.eq.s32.totalorder %s26, 1
      %p143 = por %p141, %p142
      %p145 = scmp.ne.s32.totalorder %s130, %s144
      %p146 = scmp.eq.s32.totalorder %s26, 0
      %p147 = por %p145, %p146
      %s149 = sadd.s32 %s148, 1
      %p152 = scmp.eq.s32.totalorder %s20, 1
      %p153 = scmp.ne.s32.totalorder %s148, %s150
      %p154 = scmp.eq.s32.totalorder %s20, 0
      %p155 = por %p153, %p154
      %p156 = scmp.ne.s32.totalorder %s148, %s150
      %p157 = scmp.eq.s32.totalorder %s25, 1
      %p158 = por %p156, %p157
      %p159 = scmp.ne.s32.totalorder %s150, %s151
      %p160 = scmp.eq.s32.totalorder %s25, 0
      %p161 = por %p159, %p160
      %p162 = scmp.ne.s32.totalorder %s150, %s151
      %p163 = scmp.eq.s32.totalorder %s26, 1
      %p164 = por %p162, %p163
      %p166 = scmp.ne.s32.totalorder %s151, %s165
      %p167 = scmp.eq.s32.totalorder %s26, 0
      %p168 = por %p166, %p167
      %s170 = sadd.s32 %s169, 1
      %p173 = scmp.eq.s32.totalorder %s20, 1
      %p174 = scmp.ne.s32.totalorder %s169, %s171
      %p175 = scmp.eq.s32.totalorder %s20, 0
      %p176 = por %p174, %p175
      %p177 = scmp.ne.s32.totalorder %s169, %s171
      %p178 = scmp.eq.s32.totalorder %s25, 1
      %p179 = por %p177, %p178
      %p180 = scmp.ne.s32.totalorder %s171, %s172
      %p181 = scmp.eq.s32.totalorder %s25, 0
      %p182 = por %p180, %p181
      %p183 = scmp.ne.s32.totalorder %s171, %s172
      %p184 = scmp.eq.s32.totalorder %s26, 1
      %p185 = por %p183, %p184
      %p187 = scmp.ne.s32.totalorder %s172, %s186
      %p188 = scmp.eq.s32.totalorder %s26, 0
      %p189 = por %p187, %p188
      %s191 = sadd.s32 %s190, 1
      %p194 = scmp.eq.s32.totalorder %s20, 1
      %p195 = scmp.ne.s32.totalorder %s190, %s192
      %p196 = scmp.eq.s32.totalorder %s20, 0
      %p197 = por %p195, %p196
      %p198 = scmp.ne.s32.totalorder %s190, %s192
      %p199 = scmp.eq.s32.totalorder %s25, 1
      %p200 = por %p198, %p199
      %p201 = scmp.ne.s32.totalorder %s192, %s193
      %p202 = scmp.eq.s32.totalorder %s25, 0
      %p203 = por %p201, %p202
      %p204 = scmp.ne.s32.totalorder %s192, %s193
      %p205 = scmp.eq.s32.totalorder %s26, 1
      %p206 = por %p204, %p205
      %p208 = scmp.ne.s32.totalorder %s193, %s207
      %p209 = scmp.eq.s32.totalorder %s26, 0
      %p210 = por %p208, %p209
      %s212 = sadd.s32 %s211, 1
      %p215 = scmp.eq.s32.totalorder %s20, 1
      %p216 = scmp.ne.s32.totalorder %s211, %s213
      %p217 = scmp.eq.s32.totalorder %s20, 0
      %p218 = por %p216, %p217
      %p219 = scmp.ne.s32.totalorder %s211, %s213
      %p220 = scmp.eq.s32.totalorder %s25, 1
      %p221 = por %p219, %p220
      %p222 = scmp.ne.s32.totalorder %s213, %s214
      %p223 = scmp.eq.s32.totalorder %s25, 0
      %p224 = por %p222, %p223
      %p225 = scmp.ne.s32.totalorder %s213, %s214
      %p226 = scmp.eq.s32.totalorder %s26, 1
      %p227 = por %p225, %p226
      %p229 = scmp.ne.s32.totalorder %s214, %s228
      %p230 = scmp.eq.s32.totalorder %s26, 0
      %p231 = por %p229, %p230
      %s233 = sadd.s32 %s232, 1
      %p236 = scmp.eq.s32.totalorder %s20, 1
      %p237 = scmp.ne.s32.totalorder %s232, %s234
      %p238 = scmp.eq.s32.totalorder %s20, 0
      %p239 = por %p237, %p238
      %p240 = scmp.ne.s32.totalorder %s232, %s234
      %p241 = scmp.eq.s32.totalorder %s25, 1
      %p242 = por %p240, %p241
      %p243 = scmp.ne.s32.totalorder %s234, %s235
      %p244 = scmp.eq.s32.totalorder %s25, 0
      %p245 = por %p243, %p244
      %p246 = scmp.ne.s32.totalorder %s234, %s235
      %p247 = scmp.eq.s32.totalorder %s26, 1
      %p248 = por %p246, %p247
      %p250 = scmp.ne.s32.totalorder %s235, %s249
      %p251 = scmp.eq.s32.totalorder %s26, 0
      %p252 = por %p250, %p251
      %s254 = sadd.s32 %s253, 1
      %p257 = scmp.eq.s32.totalorder %s20, 1
      %p258 = scmp.ne.s32.totalorder %s253, %s255
      %p259 = scmp.eq.s32.totalorder %s20, 0
      %p260 = por %p258, %p259
      %p261 = scmp.ne.s32.totalorder %s253, %s255
      %p262 = scmp.eq.s32.totalorder %s25, 1
      %p263 = por %p261, %p262
      %p264 = scmp.ne.s32.totalorder %s255, %s256
      %p265 = scmp.eq.s32.totalorder %s25, 0
      %p266 = por %p264, %p265
      %p267 = scmp.ne.s32.totalorder %s255, %s256
      %p268 = scmp.eq.s32.totalorder %s26, 1
      %p269 = por %p267, %p268
      %p271 = scmp.ne.s32.totalorder %s256, %s270
      %p272 = scmp.eq.s32.totalorder %s26, 0
      %p273 = por %p271, %p272
      %s275 = sadd.s32 %s274, 1
      %p278 = scmp.eq.s32.totalorder %s20, 1
      %p279 = scmp.ne.s32.totalorder %s274, %s276
      %p280 = scmp.eq.s32.totalorder %s20, 0
      %p281 = por %p279, %p280
      %p282 = scmp.ne.s32.totalorder %s274, %s276
      %p283 = scmp.eq.s32.totalorder %s25, 1
      %p284 = por %p282, %p283
      %p285 = scmp.ne.s32.totalorder %s276, %s277
      %p286 = scmp.eq.s32.totalorder %s25, 0
      %p287 = por %p285, %p286
      %p288 = scmp.ne.s32.totalorder %s276, %s277
      %p289 = scmp.eq.s32.totalorder %s26, 1
      %p290 = por %p288, %p289
      %p292 = scmp.ne.s32.totalorder %s277, %s291
      %p293 = scmp.eq.s32.totalorder %s26, 0
      %p294 = por %p292, %p293
      %s296 = sadd.s32 %s295, 1
      %p299 = scmp.eq.s32.totalorder %s20, 1
      %p300 = scmp.ne.s32.totalorder %s295, %s297
      %p301 = scmp.eq.s32.totalorder %s20, 0
      %p302 = por %p300, %p301
      %p303 = scmp.ne.s32.totalorder %s295, %s297
      %p304 = scmp.eq.s32.totalorder %s25, 1
      %p305 = por %p303, %p304
      %p306 = scmp.ne.s32.totalorder %s297, %s298
      %p307 = scmp.eq.s32.totalorder %s25, 0
      %p308 = por %p306, %p307
      %p309 = scmp.ne.s32.totalorder %s297, %s298
      %p310 = scmp.eq.s32.totalorder %s26, 1
      %p311 = por %p309, %p310
      %p313 = scmp.ne.s32.totalorder %s298, %s312
      %p314 = scmp.eq.s32.totalorder %s26, 0
      %p315 = por %p313, %p314
      %s317 = sadd.s32 %s316, 1
      %p320 = scmp.eq.s32.totalorder %s20, 1
      %p321 = scmp.ne.s32.totalorder %s316, %s318
      %p322 = scmp.eq.s32.totalorder %s20, 0
      %p323 = por %p321, %p322
      %p324 = scmp.ne.s32.totalorder %s316, %s318
      %p325 = scmp.eq.s32.totalorder %s25, 1
      %p326 = por %p324, %p325
      %p327 = scmp.ne.s32.totalorder %s318, %s319
      %p328 = scmp.eq.s32.totalorder %s25, 0
      %p329 = por %p327, %p328
      %p330 = scmp.ne.s32.totalorder %s318, %s319
      %p331 = scmp.eq.s32.totalorder %s26, 1
      %p332 = por %p330, %p331
      %p334 = scmp.ne.s32.totalorder %s319, %s333
      %p335 = scmp.eq.s32.totalorder %s26, 0
      %p336 = por %p334, %p335
      %s337 = ssub.s32 %s20, %s27
      %p338 = scmp.eq.s32.totalorder %s337, 0
      %s340 = sadd.s32 %s339, 1
      %s341 = scalar_select %p338, %s339, %s340
      %p344 = pneg %p338
      %p345 = scmp.eq.s32.totalorder %s20, 1
      %p346 = por %p344, %p345
      %p347 = scmp.ne.s32.totalorder %s339, %s342
      %p348 = scmp.eq.s32.totalorder %s20, 0
      %p349 = por %p347, %p348
      %p350 = scmp.ne.s32.totalorder %s339, %s342
      %p351 = scmp.eq.s32.totalorder %s25, 1
      %p352 = por %p350, %p351
      %p353 = scmp.ne.s32.totalorder %s342, %s343
      %p354 = scmp.eq.s32.totalorder %s25, 0
      %p355 = por %p353, %p354
      %p356 = scmp.ne.s32.totalorder %s342, %s343
      %p357 = scmp.eq.s32.totalorder %s26, 1
      %p358 = por %p356, %p357
      %p360 = scmp.ne.s32.totalorder %s343, %s359
      %p361 = scmp.eq.s32.totalorder %s26, 0
      %p362 = por %p360, %p361
      %p363 = scmp.le.s32.totalorder 1, %s20
      %p364 = scmp.lt.s32.totalorder %s20, 3
      %p365 = pnand %p363, %p364
      %p366 = pneg %p365
      // Predicated region
      $region9: #{acmodel_sr_forward.1} parent=5 // pred_check
        _
      $region10: #{acmodel_sr_forward.1} parent=5 // pred_check_branch
        %368 = sbr.rel (%p365) target = $region12
      $region11: #{acmodel_sr_forward.1} parent=5 // pred_region
        %s369 = ssub.s32 %s20, 1
        // Predicated region
        $region13: #{acmodel_sr_forward.1} parent=11 // pred_check
          %p370 = pneg %p119
        $region14: #{acmodel_sr_forward.1} parent=11 // pred_check_branch
          %372 = sbr.rel (%p370) target = $region16
        $region15: #{acmodel_sr_forward.1} parent=11 // pred_region
          _
        $region16: #{acmodel_sr_forward.1} parent=11 // pred_fallthru
          _
        // Predicated region
        $region17: #{acmodel_sr_forward.1} parent=11 // pred_check
          %p373 = pneg %p140
        $region18: #{acmodel_sr_forward.1} parent=11 // pred_check_branch
          %375 = sbr.rel (%p373) target = $region20
        $region19: #{acmodel_sr_forward.1} parent=11 // pred_region
          _
        $region20: #{acmodel_sr_forward.1} parent=11 // pred_fallthru
          _
        // Predicated region
        $region21: #{acmodel_sr_forward.1} parent=11 // pred_check
          %p376 = pneg %p161
        $region22: #{acmodel_sr_forward.1} parent=11 // pred_check_branch
          %378 = sbr.rel (%p376) target = $region24
        $region23: #{acmodel_sr_forward.1} parent=11 // pred_region
          _
        $region24: #{acmodel_sr_forward.1} parent=11 // pred_fallthru
          _
        // Predicated region
        $region25: #{acmodel_sr_forward.1} parent=11 // pred_check
          %p379 = pneg %p182
        $region26: #{acmodel_sr_forward.1} parent=11 // pred_check_branch
          %381 = sbr.rel (%p379) target = $region28
        $region27: #{acmodel_sr_forward.1} parent=11 // pred_region
          _
        $region28: #{acmodel_sr_forward.1} parent=11 // pred_fallthru
          _
        // Predicated region
        $region29: #{acmodel_sr_forward.1} parent=11 // pred_check
          %p382 = pneg %p203
        $region30: #{acmodel_sr_forward.1} parent=11 // pred_check_branch
          %384 = sbr.rel (%p382) target = $region32
        $region31: #{acmodel_sr_forward.1} parent=11 // pred_region
          _
        $region32: #{acmodel_sr_forward.1} parent=11 // pred_fallthru
          _
        // Predicated region
        $region33: #{acmodel_sr_forward.1} parent=11 // pred_check
          %p385 = pneg %p224
        $region34: #{acmodel_sr_forward.1} parent=11 // pred_check_branch
          %387 = sbr.rel (%p385) target = $region36
        $region35: #{acmodel_sr_forward.1} parent=11 // pred_region
          _
        $region36: #{acmodel_sr_forward.1} parent=11 // pred_fallthru
          _
        // Predicated region
        $region37: #{acmodel_sr_forward.1} parent=11 // pred_check
          %p388 = pneg %p245
        $region38: #{acmodel_sr_forward.1} parent=11 // pred_check_branch
          %390 = sbr.rel (%p388) target = $region40
        $region39: #{acmodel_sr_forward.1} parent=11 // pred_region
          _
        $region40: #{acmodel_sr_forward.1} parent=11 // pred_fallthru
          _
        // Predicated region
        $region41: #{acmodel_sr_forward.1} parent=11 // pred_check
          %p391 = pneg %p266
        $region42: #{acmodel_sr_forward.1} parent=11 // pred_check_branch
          %393 = sbr.rel (%p391) target = $region44
        $region43: #{acmodel_sr_forward.1} parent=11 // pred_region
          _
        $region44: #{acmodel_sr_forward.1} parent=11 // pred_fallthru
          _
        // Predicated region
        $region45: #{acmodel_sr_forward.1} parent=11 // pred_check
          %p394 = pneg %p287
        $region46: #{acmodel_sr_forward.1} parent=11 // pred_check_branch
          %396 = sbr.rel (%p394) target = $region48
        $region47: #{acmodel_sr_forward.1} parent=11 // pred_region
          _
        $region48: #{acmodel_sr_forward.1} parent=11 // pred_fallthru
          _
        // Predicated region
        $region49: #{acmodel_sr_forward.1} parent=11 // pred_check
          %p397 = pneg %p308
        $region50: #{acmodel_sr_forward.1} parent=11 // pred_check_branch
          %399 = sbr.rel (%p397) target = $region52
        $region51: #{acmodel_sr_forward.1} parent=11 // pred_region
          _
        $region52: #{acmodel_sr_forward.1} parent=11 // pred_fallthru
          _
        // Predicated region
        $region53: #{acmodel_sr_forward.1} parent=11 // pred_check
          %p400 = pneg %p329
        $region54: #{acmodel_sr_forward.1} parent=11 // pred_check_branch
          %402 = sbr.rel (%p400) target = $region56
        $region55: #{acmodel_sr_forward.1} parent=11 // pred_region
          _
        $region56: #{acmodel_sr_forward.1} parent=11 // pred_fallthru
          _
      $region12: #{acmodel_sr_forward.1} parent=5 // pred_fallthru
        _
      %p403 = scmp.lt.s32.totalorder %s20, 2
      // Predicated region
      $region57: #{acmodel_sr_forward.1} parent=5 // pred_check
        %p404 = pneg %p403
      $region58: #{acmodel_sr_forward.1} parent=5 // pred_check_branch
        %406 = sbr.rel (%p404) target = $region60
      $region59: #{acmodel_sr_forward.1} parent=5 // pred_region
        // Predicated region
        $region61: #{acmodel_sr_forward.1} parent=59 // pred_check
          %p407 = pneg %p40
        $region62: #{acmodel_sr_forward.1} parent=59 // pred_check_branch
          %409 = sbr.rel (%p407) target = $region64
        $region63: #{acmodel_sr_forward.1} parent=59 // pred_region
          %s410 = sand.u32 %s30, 1
          %s411 = sand.u32 %s30, 1
          %s412 = smul.addr %s411, 32
          %s413 = scalar_lea.vmem [#allocation2], %s412
          %s414 = smul.u32 2, %s20
          %s415 = smul.addr %s414, 4
          %s416 = scalar_lea.vmem %s0, %s415
          // Predicated region
          $region65: #{acmodel_sr_forward.1} parent=63 // pred_check
            _
          $region66: #{acmodel_sr_forward.1} parent=63 // pred_check_branch
            %418 = sbr.rel (0) target = $region68
          $region67: #{acmodel_sr_forward.1} parent=63 // pred_region
            // Predicated region
            $region69: #{acmodel_sr_forward.1} parent=67 // pred_check
              _
            $region70: #{acmodel_sr_forward.1} parent=67 // pred_check_branch
              %420 = sbr.rel target = $region72
            $region71: #{acmodel_sr_forward.1} parent=67 // pred_region
              // Predicated region
              $region84: #{acmodel_sr_forward.1} parent=71 // pred_check
                _
              $region85: #{acmodel_sr_forward.1} parent=71 // pred_check_branch
                %449 = sbr.rel (0) target = $region87
              $region86: #{acmodel_sr_forward.1} parent=71 // pred_region
                loop: start=0, step=1, limit=1
                $region88: #{acmodel_sr_forward.1} parent=86 // loop_pre_header
                  _
                $region89: #{acmodel_sr_forward.1} parent=86 // loop_header
                  %s451 = sphi 0, %s455
                  %p452 = scmp.ge.s32.totalorder %s451, 1
                  %s456 = sphi %s416, %s416
                  %s457 = sphi %s413, %s413
                $region90: #{acmodel_sr_forward.1} parent=86 // loop_header_branch
                  %454 = sbr.rel (%p452) target = $region94
                $region91: #{acmodel_sr_forward.1} parent=86 // loop_body
                  _
                $region92: #{acmodel_sr_forward.1} parent=86 // loop_footer
                  %s455 = sadd.s32 1, %s451
                $region93: #{acmodel_sr_forward.1} parent=86 // loop_footer_branch
                  %450 = sbr.rel target = $region89
                $region94: #{acmodel_sr_forward.1} parent=86 // loop_exit
                  _
                loop: start=0, step=1, limit=1
                $region95: #{acmodel_sr_forward.1} parent=86 // loop_pre_header
                  _
                $region96: #{acmodel_sr_forward.1} parent=86 // loop_header
                  %s460 = sphi 0, %s464
                  %p461 = scmp.ge.s32.totalorder %s460, 1
                  %s465 = sphi %s416, %s416
                  %s466 = sphi %s413, %s413
                $region97: #{acmodel_sr_forward.1} parent=86 // loop_header_branch
                  %463 = sbr.rel (%p461) target = $region101
                $region98: #{acmodel_sr_forward.1} parent=86 // loop_body
                  %v467 = vld [vmem:[%s465] sm:$0xf]
                  %468 = vst [vmem:[%s466] sm:$0xf] %v467
                  %v469 = vld [vmem:[%s465 + $0x4] sm:$0xf]
                  %470 = vst [vmem:[%s466 + $0x4] sm:$0xf] %v469
                  %v471 = vld [vmem:[%s465 + $0x10] sm:$0xf]
                  %472 = vst [vmem:[%s466 + $0x8] sm:$0xf] %v471
                  %v473 = vld [vmem:[%s465 + $0x14] sm:$0xf]
                  %474 = vst [vmem:[%s466 + $0xc] sm:$0xf] %v473
                  %v475 = vld [vmem:[%s465 + $0x20] sm:$0xf]
                  %476 = vst [vmem:[%s466 + $0x10] sm:$0xf] %v475
                  %v477 = vld [vmem:[%s465 + $0x24] sm:$0xf]
                  %478 = vst [vmem:[%s466 + $0x14] sm:$0xf] %v477
                  %v479 = vld [vmem:[%s465 + $0x30] sm:$0xf]
                  %480 = vst [vmem:[%s466 + $0x18] sm:$0xf] %v479
                  %v481 = vld [vmem:[%s465 + $0x34] sm:$0xf]
                  %482 = vst [vmem:[%s466 + $0x1c] sm:$0xf] %v481
                $region99: #{acmodel_sr_forward.1} parent=86 // loop_footer
                  %s464 = sadd.s32 1, %s460
                $region100: #{acmodel_sr_forward.1} parent=86 // loop_footer_branch
                  %459 = sbr.rel target = $region96
                $region101: #{acmodel_sr_forward.1} parent=86 // loop_exit
                  _
              $region87: #{acmodel_sr_forward.1} parent=71 // pred_fallthru
                _
            $region72: #{acmodel_sr_forward.1} parent=67 // pred_fallthru
              _
            // Predicated region
            $region73: #{acmodel_sr_forward.1} parent=67 // pred_check
              _
            $region74: #{acmodel_sr_forward.1} parent=67 // pred_check_branch
              %422 = sbr.rel (0) target = $region76
            $region75: #{acmodel_sr_forward.1} parent=67 // pred_region
              loop: start=0, step=1, limit=1
              $region77: #{acmodel_sr_forward.1} parent=75 // loop_pre_header
                _
              $region78: #{acmodel_sr_forward.1} parent=75 // loop_header
                %s425 = sphi 0, %s429
                %p426 = scmp.ge.s32.totalorder %s425, 1
                %s430 = sphi %s416, %s416
                %s431 = sphi %s413, %s413
              $region79: #{acmodel_sr_forward.1} parent=75 // loop_header_branch
                %428 = sbr.rel (%p426) target = $region83
              $region80: #{acmodel_sr_forward.1} parent=75 // loop_body
                %v432 = vld [vmem:[%s430] sm:$0xf]
                %433 = vst [vmem:[%s431] sm:$0xf] %v432
                %v434 = vld [vmem:[%s430 + $0x4] sm:$0xf]
                %435 = vst [vmem:[%s431 + $0x4] sm:$0xf] %v434
                %v436 = vld [vmem:[%s430 + $0x10] sm:$0xf]
                %437 = vst [vmem:[%s431 + $0x8] sm:$0xf] %v436
                %v438 = vld [vmem:[%s430 + $0x14] sm:$0xf]
                %439 = vst [vmem:[%s431 + $0xc] sm:$0xf] %v438
                %v440 = vld [vmem:[%s430 + $0x20] sm:$0xf]
                %441 = vst [vmem:[%s431 + $0x10] sm:$0xf] %v440
                %v442 = vld [vmem:[%s430 + $0x24] sm:$0xf]
                %443 = vst [vmem:[%s431 + $0x14] sm:$0xf] %v442
                %v444 = vld [vmem:[%s430 + $0x30] sm:$0xf]
                %445 = vst [vmem:[%s431 + $0x18] sm:$0xf] %v444
                %v446 = vld [vmem:[%s430 + $0x34] sm:$0xf]
                %447 = vst [vmem:[%s431 + $0x1c] sm:$0xf] %v446
              $region81: #{acmodel_sr_forward.1} parent=75 // loop_footer
                %s429 = sadd.s32 1, %s425
              $region82: #{acmodel_sr_forward.1} parent=75 // loop_footer_branch
                %424 = sbr.rel target = $region78
              $region83: #{acmodel_sr_forward.1} parent=75 // loop_exit
                _
            $region76: #{acmodel_sr_forward.1} parent=67 // pred_fallthru
              _
          $region68: #{acmodel_sr_forward.1} parent=63 // pred_fallthru
            _
          %483 = vnop
        $region64: #{acmodel_sr_forward.1} parent=59 // pred_fallthru
          _
        // Predicated region
        $region102: #{acmodel_sr_forward.1} parent=59 // pred_check
          %p484 = pneg %p66
        $region103: #{acmodel_sr_forward.1} parent=59 // pred_check_branch
          %486 = sbr.rel (%p484) target = $region105
        $region104: #{acmodel_sr_forward.1} parent=59 // pred_region
          %s487 = sand.u32 %s56, 1
          %s488 = sand.u32 %s56, 1
          %s489 = smul.addr %s488, 24
          %s490 = scalar_lea.vmem [#allocation3], %s489
          %s491 = smul.u32 2, %s20
          %s492 = smul.addr %s491, 4
          %s493 = scalar_lea.vmem %s1, %s492
          // Predicated region
          $region106: #{acmodel_sr_forward.1} parent=104 // pred_check
            _
          $region107: #{acmodel_sr_forward.1} parent=104 // pred_check_branch
            %495 = sbr.rel (0) target = $region109
          $region108: #{acmodel_sr_forward.1} parent=104 // pred_region
            // Predicated region
            $region110: #{acmodel_sr_forward.1} parent=108 // pred_check
              _
            $region111: #{acmodel_sr_forward.1} parent=108 // pred_check_branch
              %497 = sbr.rel target = $region113
            $region112: #{acmodel_sr_forward.1} parent=108 // pred_region
              // Predicated region
              $region125: #{acmodel_sr_forward.1} parent=112 // pred_check
                _
              $region126: #{acmodel_sr_forward.1} parent=112 // pred_check_branch
                %522 = sbr.rel (0) target = $region128
              $region127: #{acmodel_sr_forward.1} parent=112 // pred_region
                loop: start=0, step=1, limit=1
                $region129: #{acmodel_sr_forward.1} parent=127 // loop_pre_header
                  _
                $region130: #{acmodel_sr_forward.1} parent=127 // loop_header
                  %s524 = sphi 0, %s528
                  %p525 = scmp.ge.s32.totalorder %s524, 1
                  %s529 = sphi %s493, %s493
                  %s530 = sphi %s490, %s490
                $region131: #{acmodel_sr_forward.1} parent=127 // loop_header_branch
                  %527 = sbr.rel (%p525) target = $region135
                $region132: #{acmodel_sr_forward.1} parent=127 // loop_body
                  _
                $region133: #{acmodel_sr_forward.1} parent=127 // loop_footer
                  %s528 = sadd.s32 1, %s524
                $region134: #{acmodel_sr_forward.1} parent=127 // loop_footer_branch
                  %523 = sbr.rel target = $region130
                $region135: #{acmodel_sr_forward.1} parent=127 // loop_exit
                  _
                loop: start=0, step=1, limit=1
                $region136: #{acmodel_sr_forward.1} parent=127 // loop_pre_header
                  _
                $region137: #{acmodel_sr_forward.1} parent=127 // loop_header
                  %s533 = sphi 0, %s537
                  %p534 = scmp.ge.s32.totalorder %s533, 1
                  %s538 = sphi %s493, %s493
                  %s539 = sphi %s490, %s490
                $region138: #{acmodel_sr_forward.1} parent=127 // loop_header_branch
                  %536 = sbr.rel (%p534) target = $region142
                $region139: #{acmodel_sr_forward.1} parent=127 // loop_body
                  %v540 = vld [vmem:[%s538] sm:$0xf]
                  %541 = vst [vmem:[%s539] sm:$0xf] %v540
                  %v542 = vld [vmem:[%s538 + $0x4] sm:$0xf]
                  %543 = vst [vmem:[%s539 + $0x4] sm:$0xf] %v542
                  %v544 = vld [vmem:[%s538 + $0x10] sm:$0xf]
                  %545 = vst [vmem:[%s539 + $0x8] sm:$0xf] %v544
                  %v546 = vld [vmem:[%s538 + $0x14] sm:$0xf]
                  %547 = vst [vmem:[%s539 + $0xc] sm:$0xf] %v546
                  %v548 = vld [vmem:[%s538 + $0x20] sm:$0xf]
                  %549 = vst [vmem:[%s539 + $0x10] sm:$0xf] %v548
                  %v550 = vld [vmem:[%s538 + $0x24] sm:$0xf]
                  %551 = vst [vmem:[%s539 + $0x14] sm:$0xf] %v550
                $region140: #{acmodel_sr_forward.1} parent=127 // loop_footer
                  %s537 = sadd.s32 1, %s533
                $region141: #{acmodel_sr_forward.1} parent=127 // loop_footer_branch
                  %532 = sbr.rel target = $region137
                $region142: #{acmodel_sr_forward.1} parent=127 // loop_exit
                  _
              $region128: #{acmodel_sr_forward.1} parent=112 // pred_fallthru
                _
            $region113: #{acmodel_sr_forward.1} parent=108 // pred_fallthru
              _
            // Predicated region
            $region114: #{acmodel_sr_forward.1} parent=108 // pred_check
              _
            $region115: #{acmodel_sr_forward.1} parent=108 // pred_check_branch
              %499 = sbr.rel (0) target = $region117
            $region116: #{acmodel_sr_forward.1} parent=108 // pred_region
              loop: start=0, step=1, limit=1
              $region118: #{acmodel_sr_forward.1} parent=116 // loop_pre_header
                _
              $region119: #{acmodel_sr_forward.1} parent=116 // loop_header
                %s502 = sphi 0, %s506
                %p503 = scmp.ge.s32.totalorder %s502, 1
                %s507 = sphi %s493, %s493
                %s508 = sphi %s490, %s490
              $region120: #{acmodel_sr_forward.1} parent=116 // loop_header_branch
                %505 = sbr.rel (%p503) target = $region124
              $region121: #{acmodel_sr_forward.1} parent=116 // loop_body
                %v509 = vld [vmem:[%s507] sm:$0xf]
                %510 = vst [vmem:[%s508] sm:$0xf] %v509
                %v511 = vld [vmem:[%s507 + $0x4] sm:$0xf]
                %512 = vst [vmem:[%s508 + $0x4] sm:$0xf] %v511
                %v513 = vld [vmem:[%s507 + $0x10] sm:$0xf]
                %514 = vst [vmem:[%s508 + $0x8] sm:$0xf] %v513
                %v515 = vld [vmem:[%s507 + $0x14] sm:$0xf]
                %516 = vst [vmem:[%s508 + $0xc] sm:$0xf] %v515
                %v517 = vld [vmem:[%s507 + $0x20] sm:$0xf]
                %518 = vst [vmem:[%s508 + $0x10] sm:$0xf] %v517
                %v519 = vld [vmem:[%s507 + $0x24] sm:$0xf]
                %520 = vst [vmem:[%s508 + $0x14] sm:$0xf] %v519
              $region122: #{acmodel_sr_forward.1} parent=116 // loop_footer
                %s506 = sadd.s32 1, %s502
              $region123: #{acmodel_sr_forward.1} parent=116 // loop_footer_branch
                %501 = sbr.rel target = $region119
              $region124: #{acmodel_sr_forward.1} parent=116 // loop_exit
                _
            $region117: #{acmodel_sr_forward.1} parent=108 // pred_fallthru
              _
          $region109: #{acmodel_sr_forward.1} parent=104 // pred_fallthru
            _
          %552 = vnop
        $region105: #{acmodel_sr_forward.1} parent=59 // pred_fallthru
          _
        // Predicated region
        $region143: #{acmodel_sr_forward.1} parent=59 // pred_check
          %p553 = pneg %p92
        $region144: #{acmodel_sr_forward.1} parent=59 // pred_check_branch
          %555 = sbr.rel (%p553) target = $region146
        $region145: #{acmodel_sr_forward.1} parent=59 // pred_region
          %s556 = smul.u32 2, %s20
          %p557 = scmp.lt.s32.totalorder %s556, 3
          %s558 = scalar_select %p557, %s556, 3
          %s559 = smul.addr %s558, 4
          %s560 = scalar_lea.vmem %s2, %s559
          %s561 = smul.u32 2, %s20
        $region146: #{acmodel_sr_forward.1} parent=59 // pred_fallthru
          _
      $region60: #{acmodel_sr_forward.1} parent=5 // pred_fallthru
        _
      %p562 = scmp.le.s32.totalorder 1, %s20
      %p563 = scmp.lt.s32.totalorder %s20, 3
      %p564 = pnand %p562, %p563
      %p565 = pneg %p564
      // Predicated region
      $region147: #{acmodel_sr_forward.1} parent=5 // pred_check
        _
      $region148: #{acmodel_sr_forward.1} parent=5 // pred_check_branch
        %567 = sbr.rel (%p564) target = $region150
      $region149: #{acmodel_sr_forward.1} parent=5 // pred_region
        %s568 = ssub.s32 %s20, 1
        %s569 = sand.u32 %s33, 1
        %s570 = sand.u32 %s33, 1
        %s571 = smul.addr %s570, 32
        %s572 = scalar_lea.vmem [#allocation2], %s571
        // Predicated region
        $region151: #{acmodel_sr_forward.1} parent=149 // pred_check
          %p573 = pneg %p46
        $region152: #{acmodel_sr_forward.1} parent=149 // pred_check_branch
          %575 = sbr.rel (%p573) target = $region154
        $region153: #{acmodel_sr_forward.1} parent=149 // pred_region
          _
        $region154: #{acmodel_sr_forward.1} parent=149 // pred_fallthru
          _
        %s576 = sand.u32 %s59, 1
        %s577 = sand.u32 %s59, 1
        %s578 = smul.addr %s577, 24
        %s579 = scalar_lea.vmem [#allocation3], %s578
        // Predicated region
        $region155: #{acmodel_sr_forward.1} parent=149 // pred_check
          %p580 = pneg %p72
        $region156: #{acmodel_sr_forward.1} parent=149 // pred_check_branch
          %582 = sbr.rel (%p580) target = $region158
        $region157: #{acmodel_sr_forward.1} parent=149 // pred_region
          _
        $region158: #{acmodel_sr_forward.1} parent=149 // pred_fallthru
          _
        %s583 = sand.u32 %s33, 1
        %s584 = sand.u32 %s33, 1
        %s585 = smul.addr %s584, 32
        %s586 = scalar_lea.vmem [#allocation2], %s585
        %p587 = pneg %p46
        %p588 = pneg %p43
        %s589 = sand.u32 %s59, 1
        %s590 = sand.u32 %s59, 1
        %s591 = smul.addr %s590, 24
        %s592 = scalar_lea.vmem [#allocation3], %s591
        %p593 = pneg %p72
        %p594 = pneg %p69
        %s595 = smul.u32 2, %s25
        %p596 = scmp.lt.s32.totalorder %s595, 3
        %s597 = scalar_select %p596, %s595, 3
        %s598 = smul.addr %s597, 4
        %s599 = scalar_lea.vmem %s2, %s598
        %p600 = pneg %p98
        %p601 = pneg %p95
        %p602 = pneg %p119
        %p603 = pneg %p116
        %p604 = pneg %p140
        %p605 = pneg %p137
        %p606 = pneg %p161
        %p607 = pneg %p158
        %p608 = pneg %p182
        %p609 = pneg %p179
        %p610 = pneg %p203
        %p611 = pneg %p200
        %p612 = pneg %p224
        %p613 = pneg %p221
        %p614 = pneg %p245
        %p615 = pneg %p242
        %p616 = pneg %p266
        %p617 = pneg %p263
        %p618 = pneg %p287
        %p619 = pneg %p284
        %p620 = pneg %p308
        %p621 = pneg %p305
        %p622 = pneg %p329
        %p623 = pneg %p326
        %p624 = pneg %p355
        %p625 = pneg %p352
        %s626 = smul.u32 2, %s25
        %p627 = scmp.lt.s32.totalorder %s626, 3
        %s628 = scalar_select %p627, %s626, 3
        %s629 = smul.addr %s628, 8
        %s630 = scalar_lea.vmem %s14, %s629
        %s631 = smul.u32 2, %s25
        %s632 = smul.u32 2, %s25
        %s633 = smul.u32 2, %s25
        %p634 = scmp.lt.s32.totalorder %s633, 3
        %s635 = scalar_select %p634, %s633, 3
        %s636 = smul.addr %s635, 4
        %s637 = scalar_lea.vmem %s2, %s636
        %s638 = smul.u32 2, %s25
        %s639 = smul.u32 2, %s25
        %p640 = scmp.lt.s32.totalorder %s639, 3
        %s641 = scalar_select %p640, %s639, 3
        %s642 = smul.addr %s641, 8
        %s643 = scalar_lea.vmem %s14, %s642
        %s644 = smul.u32 2, %s25
        %v646 = vld [vmem:[%s3] sm:$0xf]
        %v647 = vld [vmem:[%s3 + $0x4] sm:$0xf]
        %v648 = vld [vmem:[%s3 + $0x8] sm:$0xf]
        %s649 = scalar_lea.vmem %s3, 12
        %v650 = vld [vmem:[%s649] sm:$0xf]
        %v651 = vld [vmem:[%s649 + $0x4] sm:$0xf]
        %v652 = vld [vmem:[%s649 + $0x8] sm:$0xf]
        %v653 = vld [vmem:[%s4] sm:$0x1]
        %v654 = vld [vmem:[%s5] sm:$0xf]
        %v655 = vld [vmem:[%s5 + $0x4] sm:$0xf]
        %v656 = vld [vmem:[%s5 + $0x8] sm:$0xf]
        %v657 = vld [vmem:[%s5 + $0xc] sm:$0xf]
        %v658 = vld [vmem:[%s5 + $0x10] sm:$0xf]
        %v659 = vld [vmem:[%s5 + $0x14] sm:$0xf]
        %s660 = scalar_lea.vmem %s5, 24
        %v661 = vld [vmem:[%s660] sm:$0xf]
        %v662 = vld [vmem:[%s660 + $0x4] sm:$0xf]
        %v663 = vld [vmem:[%s660 + $0x8] sm:$0xf]
        %v664 = vld [vmem:[%s660 + $0xc] sm:$0xf]
        %v665 = vld [vmem:[%s660 + $0x10] sm:$0xf]
        %v666 = vld [vmem:[%s660 + $0x14] sm:$0xf]
        %v667 = vld [vmem:[%s6] sm:$0x1]
        %v668 = vld [vmem:[%s7] sm:$0xf]
        %v669 = vld [vmem:[%s7 + $0x4] sm:$0xf]
        %v670 = vld [vmem:[%s7 + $0x8] sm:$0xf]
        %v671 = vld [vmem:[%s7 + $0xc] sm:$0xf]
        %v672 = vld [vmem:[%s7 + $0x10] sm:$0xf]
        %v673 = vld [vmem:[%s7 + $0x14] sm:$0xf]
        %v674 = vld [vmem:[%s7 + $0x18] sm:$0xf]
        %v675 = vld [vmem:[%s7 + $0x1c] sm:$0xf]
        %s676 = scalar_lea.vmem %s7, 32
        %v677 = vld [vmem:[%s676] sm:$0xf]
        %v678 = vld [vmem:[%s676 + $0x4] sm:$0xf]
        %v679 = vld [vmem:[%s676 + $0x8] sm:$0xf]
        %v680 = vld [vmem:[%s676 + $0xc] sm:$0xf]
        %v681 = vld [vmem:[%s676 + $0x10] sm:$0xf]
        %v682 = vld [vmem:[%s676 + $0x14] sm:$0xf]
        %v683 = vld [vmem:[%s676 + $0x18] sm:$0xf]
        %v684 = vld [vmem:[%s676 + $0x1c] sm:$0xf]
        %v685 = vld [vmem:[%s8] sm:$0x1]
        %v686 = vld [vmem:[%s572] sm:$0xf]
        %v687 = vld [vmem:[%s572 + $0x4] sm:$0xf]
        %v688 = vld [vmem:[%s579] sm:$0xf]
        %v689 = vld [vmem:[%s579 + $0x4] sm:$0xf]
        %s690 = scalar_lea.vmem %s572, 8 [#allocation2]
        %v691 = vld [vmem:[%s690] sm:$0xf]
        %v692 = vld [vmem:[%s690 + $0x4] sm:$0xf]
        %v695 = vunpack.c.l.b16 %v688
        %v696 = vunpack.c.l.b16 %v689
        %v697 = vpack.c.b16 %v696, %v695
        %v701 = vunpack.c.l.b16 %v650
        %v702 = vunpack.c.l.b16 %v651
        %v703 = vunpack.c.l.b16 %v652
        %v704 = vpack.c.b16 %v702, %v701
        %v705 = vpack.c.b16 %v703, %v703
        %vm707 = vcmask 195584
        %v709 = vsel %vm707, %v697, 0
        %vm711 = vcmask 1043456
        %v713 = vsel %vm711, %v705, 0
        %715 = vmatprep.subr.bf16.mxu0 0
        %716 = vmatpush1.bf16.msra.mxu0 %v704
        %717 = vmatprep.subr.bf16.mxu0 0
        %718 = vmatpush1.bf16.msra.mxu0 %v713
        %719 = vmatprep.subr.bf16.mxu0 0
        %720 = vmatpush1.bf16.msra.mxu0 0
        %721 = vmatprep.subr.bf16.mxu0 0
        %722 = vmatpush1.bf16.msra.mxu0 0
        %723 = vmatprep.subr.bf16.mxu0 0
        %724 = vmatpush1.bf16.msra.mxu0 0
        %725 = vmatprep.subr.bf16.mxu0 0
        %726 = vmatpush1.bf16.msra.mxu0 0
        %727 = vmatprep.subr.bf16.mxu0 0
        %728 = vmatpush1.bf16.msra.mxu0 0
        %729 = vmatprep.subr.bf16.mxu0 0
        %730 = vmatpush1.bf16.msra.mxu0 0
        %731 = vmatprep.subr.bf16.mxu0 0
        %732 = vmatpush1.bf16.msra.mxu0 0
        %733 = vmatprep.subr.bf16.mxu0 0
        %734 = vmatpush1.bf16.msra.mxu0 0
        %735 = vmatprep.subr.bf16.mxu0 0
        %736 = vmatpush1.bf16.msra.mxu0 0
        %737 = vmatprep.subr.bf16.mxu0 0
        %738 = vmatpush1.bf16.msra.mxu0 0
        %739 = vmatprep.subr.bf16.mxu0 0
        %740 = vmatpush1.bf16.msra.mxu0 0
        %741 = vmatprep.subr.bf16.mxu0 0
        %742 = vmatpush1.bf16.msra.mxu0 0
        %743 = vmatprep.subr.bf16.mxu0 0
        %744 = vmatpush1.bf16.msra.mxu0 0
        %745 = vmatprep.subr.bf16.mxu0 0
        %746 = vmatpush1.bf16.msra.mxu0 0
        %747 = vmatprep.mubr.bf16.mxu0 0
        %748 = vmatmul.mubr.bf16.gmra.mrb[0].mxu0 %v709
        %v749 = vpop.f32.mrb[0].mxu0
        %v750 = vadd.f32 0.0, %v749
        %v751 = vpop.f32.mrb[0].mxu0
        %v752 = vpop.f32.mrb[0].mxu0
        %v753 = vadd.f32 0.0, %v752
        %v754 = vpop.f32.mrb[0].mxu0
        %755 = vdwg.mxu0
        %v758 = vunpack.c.l.b16 %v686
        %v759 = vunpack.c.l.b16 %v687
        %v760 = vpack.c.b16 %v759, %v758
        %v764 = vunpack.c.l.b16 %v646
        %v765 = vunpack.c.l.b16 %v647
        %v766 = vunpack.c.l.b16 %v648
        %v767 = vpack.c.b16 %v765, %v764
        %v768 = vpack.c.b16 %v766, %v766
        %v771 = vsel %vm707, %v760, 0
        %v774 = vsel %vm711, %v768, 0
        %776 = vmatprep.subr.bf16.mxu0 0
        %777 = vmatpush1.bf16.msra.mxu0 %v767
        %778 = vmatprep.subr.bf16.mxu0 0
        %779 = vmatpush1.bf16.msra.mxu0 %v774
        %780 = vmatprep.subr.bf16.mxu0 0
        %781 = vmatpush1.bf16.msra.mxu0 0
        %782 = vmatprep.subr.bf16.mxu0 0
        %783 = vmatpush1.bf16.msra.mxu0 0
        %784 = vmatprep.subr.bf16.mxu0 0
        %785 = vmatpush1.bf16.msra.mxu0 0
        %786 = vmatprep.subr.bf16.mxu0 0
        %787 = vmatpush1.bf16.msra.mxu0 0
        %788 = vmatprep.subr.bf16.mxu0 0
        %789 = vmatpush1.bf16.msra.mxu0 0
        %790 = vmatprep.subr.bf16.mxu0 0
        %791 = vmatpush1.bf16.msra.mxu0 0
        %792 = vmatprep.subr.bf16.mxu0 0
        %793 = vmatpush1.bf16.msra.mxu0 0
        %794 = vmatprep.subr.bf16.mxu0 0
        %795 = vmatpush1.bf16.msra.mxu0 0
        %796 = vmatprep.subr.bf16.mxu0 0
        %797 = vmatpush1.bf16.msra.mxu0 0
        %798 = vmatprep.subr.bf16.mxu0 0
        %799 = vmatpush1.bf16.msra.mxu0 0
        %800 = vmatprep.subr.bf16.mxu0 0
        %801 = vmatpush1.bf16.msra.mxu0 0
        %802 = vmatprep.subr.bf16.mxu0 0
        %803 = vmatpush1.bf16.msra.mxu0 0
        %804 = vmatprep.subr.bf16.mxu0 0
        %805 = vmatpush1.bf16.msra.mxu0 0
        %806 = vmatprep.subr.bf16.mxu0 0
        %807 = vmatpush1.bf16.msra.mxu0 0
        %808 = vmatprep.mubr.bf16.mxu0 0
        %809 = vmatmul.mubr.bf16.gmra.mrb[0].mxu0 %v771
        %v810 = vpop.f32.mrb[0].mxu0
        %v811 = vadd.f32 %v750, %v810
        %v812 = vpop.f32.mrb[0].mxu0
        %v813 = vpop.f32.mrb[0].mxu0
        %v814 = vadd.f32 %v753, %v813
        %v815 = vpop.f32.mrb[0].mxu0
        %816 = vdwg.mxu0
        %v819 = vunpack.c.l.b16 %v691
        %v820 = vunpack.c.l.b16 %v692
        %v821 = vpack.c.b16 %v820, %v819
        %v823 = vsel %vm707, %v821, 0
        %825 = vmatprep.subr.bf16.mxu0 0
        %826 = vmatpush1.bf16.msra.mxu0 %v704
        %827 = vmatprep.subr.bf16.mxu0 0
        %828 = vmatpush1.bf16.msra.mxu0 %v713
        %829 = vmatprep.subr.bf16.mxu0 0
        %830 = vmatpush1.bf16.msra.mxu0 0
        %831 = vmatprep.subr.bf16.mxu0 0
        %832 = vmatpush1.bf16.msra.mxu0 0
        %833 = vmatprep.subr.bf16.mxu0 0
        %834 = vmatpush1.bf16.msra.mxu0 0
        %835 = vmatprep.subr.bf16.mxu0 0
        %836 = vmatpush1.bf16.msra.mxu0 0
        %837 = vmatprep.subr.bf16.mxu0 0
        %838 = vmatpush1.bf16.msra.mxu0 0
        %839 = vmatprep.subr.bf16.mxu0 0
        %840 = vmatpush1.bf16.msra.mxu0 0
        %841 = vmatprep.subr.bf16.mxu0 0
        %842 = vmatpush1.bf16.msra.mxu0 0
        %843 = vmatprep.subr.bf16.mxu0 0
        %844 = vmatpush1.bf16.msra.mxu0 0
        %845 = vmatprep.subr.bf16.mxu0 0
        %846 = vmatpush1.bf16.msra.mxu0 0
        %847 = vmatprep.subr.bf16.mxu0 0
        %848 = vmatpush1.bf16.msra.mxu0 0
        %849 = vmatprep.subr.bf16.mxu0 0
        %850 = vmatpush1.bf16.msra.mxu0 0
        %851 = vmatprep.subr.bf16.mxu0 0
        %852 = vmatpush1.bf16.msra.mxu0 0
        %853 = vmatprep.subr.bf16.mxu0 0
        %854 = vmatpush1.bf16.msra.mxu0 0
        %855 = vmatprep.subr.bf16.mxu0 0
        %856 = vmatpush1.bf16.msra.mxu0 0
        %857 = vmatprep.mubr.bf16.mxu0 0
        %858 = vmatmul.mubr.bf16.gmra.mrb[0].mxu0 %v823
        %v859 = vpop.f32.mrb[0].mxu0
        %v860 = vadd.f32 0.0, %v859
        %v861 = vpop.f32.mrb[0].mxu0
        %v862 = vpop.f32.mrb[0].mxu0
        %v863 = vadd.f32 0.0, %v862
        %v864 = vpop.f32.mrb[0].mxu0
        %865 = vdwg.mxu0
        %866 = vmatprep.subr.bf16.mxu0 0
        %867 = vmatpush1.bf16.msra.mxu0 %v767
        %868 = vmatprep.subr.bf16.mxu0 0
        %869 = vmatpush1.bf16.msra.mxu0 %v774
        %870 = vmatprep.subr.bf16.mxu0 0
        %871 = vmatpush1.bf16.msra.mxu0 0
        %872 = vmatprep.subr.bf16.mxu0 0
        %873 = vmatpush1.bf16.msra.mxu0 0
        %874 = vmatprep.subr.bf16.mxu0 0
        %875 = vmatpush1.bf16.msra.mxu0 0
        %876 = vmatprep.subr.bf16.mxu0 0
        %877 = vmatpush1.bf16.msra.mxu0 0
        %878 = vmatprep.subr.bf16.mxu0 0
        %879 = vmatpush1.bf16.msra.mxu0 0
        %880 = vmatprep.subr.bf16.mxu0 0
        %881 = vmatpush1.bf16.msra.mxu0 0
        %882 = vmatprep.subr.bf16.mxu0 0
        %883 = vmatpush1.bf16.msra.mxu0 0
        %884 = vmatprep.subr.bf16.mxu0 0
        %885 = vmatpush1.bf16.msra.mxu0 0
        %886 = vmatprep.subr.bf16.mxu0 0
        %887 = vmatpush1.bf16.msra.mxu0 0
        %888 = vmatprep.subr.bf16.mxu0 0
        %889 = vmatpush1.bf16.msra.mxu0 0
        %890 = vmatprep.subr.bf16.mxu0 0
        %891 = vmatpush1.bf16.msra.mxu0 0
        %892 = vmatprep.subr.bf16.mxu0 0
        %893 = vmatpush1.bf16.msra.mxu0 0
        %894 = vmatprep.subr.bf16.mxu0 0
        %895 = vmatpush1.bf16.msra.mxu0 0
        %896 = vmatprep.subr.bf16.mxu0 0
        %897 = vmatpush1.bf16.msra.mxu0 0
        %898 = vmatprep.mubr.bf16.mxu0 0
        %899 = vmatmul.mubr.bf16.gmra.mrb[0].mxu0 %v709
        %v900 = vpop.f32.mrb[0].mxu0
        %v901 = vadd.f32 %v860, %v900
        %v902 = vpop.f32.mrb[0].mxu0
        %v903 = vpop.f32.mrb[0].mxu0
        %v904 = vadd.f32 %v863, %v903
        %v905 = vpop.f32.mrb[0].mxu0
        %906 = vdwg.mxu0
        %v907 = vmax.f32 %v811, %v901
        %v908 = vmax.f32 %v814, %v904
        %911 = vrot.lane.b32.xlu0 %v907, 80
        %v912 = vpop.permute.xlu0 %911
        %913 = vrot.lane.b32.xlu0 %v908, 80
        %v914 = vpop.permute.xlu0 %913
        %v917 = vmax.f32 %v907, %v912
        %v918 = vmax.f32 %v908, %v914
        %v920 = vlaneseq
        %v921 = vshrl.u32 %v920, 7
        %v922 = vsub.s32 0, %v921
        %v923 = vrot.slane %v653, %v922
        %v925 = vadd.f32 %v917, %v923
        %v926 = vadd.f32 %v918, %v923
        %v927 = vmax.f32 %v925, 0.0
        %v928 = vmax.f32 %v926, 0.0
        %v929 = vpack.c.bf16 %v928, %v927
        %s930 = scalar_lea.vmem %s579, 8 [#allocation3]
        %v931 = vld [vmem:[%s930] sm:$0xf]
        %v932 = vld [vmem:[%s930 + $0x4] sm:$0xf]
        %s933 = scalar_lea.vmem %s572, 16 [#allocation2]
        %v934 = vld [vmem:[%s933] sm:$0xf]
        %v935 = vld [vmem:[%s933 + $0x4] sm:$0xf]
        %v938 = vunpack.c.l.b16 %v931
        %v939 = vunpack.c.l.b16 %v932
        %v940 = vpack.c.b16 %v939, %v938
        %v942 = vsel %vm707, %v940, 0
        %944 = vmatprep.subr.bf16.mxu0 0
        %945 = vmatpush1.bf16.msra.mxu0 %v704
        %946 = vmatprep.subr.bf16.mxu0 0
        %947 = vmatpush1.bf16.msra.mxu0 %v713
        %948 = vmatprep.subr.bf16.mxu0 0
        %949 = vmatpush1.bf16.msra.mxu0 0
        %950 = vmatprep.subr.bf16.mxu0 0
        %951 = vmatpush1.bf16.msra.mxu0 0
        %952 = vmatprep.subr.bf16.mxu0 0
        %953 = vmatpush1.bf16.msra.mxu0 0
        %954 = vmatprep.subr.bf16.mxu0 0
        %955 = vmatpush1.bf16.msra.mxu0 0
        %956 = vmatprep.subr.bf16.mxu0 0
        %957 = vmatpush1.bf16.msra.mxu0 0
        %958 = vmatprep.subr.bf16.mxu0 0
        %959 = vmatpush1.bf16.msra.mxu0 0
        %960 = vmatprep.subr.bf16.mxu0 0
        %961 = vmatpush1.bf16.msra.mxu0 0
        %962 = vmatprep.subr.bf16.mxu0 0
        %963 = vmatpush1.bf16.msra.mxu0 0
        %964 = vmatprep.subr.bf16.mxu0 0
        %965 = vmatpush1.bf16.msra.mxu0 0
        %966 = vmatprep.subr.bf16.mxu0 0
        %967 = vmatpush1.bf16.msra.mxu0 0
        %968 = vmatprep.subr.bf16.mxu0 0
        %969 = vmatpush1.bf16.msra.mxu0 0
        %970 = vmatprep.subr.bf16.mxu0 0
        %971 = vmatpush1.bf16.msra.mxu0 0
        %972 = vmatprep.subr.bf16.mxu0 0
        %973 = vmatpush1.bf16.msra.mxu0 0
        %974 = vmatprep.subr.bf16.mxu0 0
        %975 = vmatpush1.bf16.msra.mxu0 0
        %976 = vmatprep.mubr.bf16.mxu0 0
        %977 = vmatmul.mubr.bf16.gmra.mrb[0].mxu0 %v942
        %v978 = vpop.f32.mrb[0].mxu0
        %v979 = vadd.f32 0.0, %v978
        %v980 = vpop.f32.mrb[0].mxu0
        %v981 = vpop.f32.mrb[0].mxu0
        %v982 = vadd.f32 0.0, %v981
        %v983 = vpop.f32.mrb[0].mxu0
        %984 = vdwg.mxu0
        %985 = vmatprep.subr.bf16.mxu0 0
        %986 = vmatpush1.bf16.msra.mxu0 %v767
        %987 = vmatprep.subr.bf16.mxu0 0
        %988 = vmatpush1.bf16.msra.mxu0 %v774
        %989 = vmatprep.subr.bf16.mxu0 0
        %990 = vmatpush1.bf16.msra.mxu0 0
        %991 = vmatprep.subr.bf16.mxu0 0
        %992 = vmatpush1.bf16.msra.mxu0 0
        %993 = vmatprep.subr.bf16.mxu0 0
        %994 = vmatpush1.bf16.msra.mxu0 0
        %995 = vmatprep.subr.bf16.mxu0 0
        %996 = vmatpush1.bf16.msra.mxu0 0
        %997 = vmatprep.subr.bf16.mxu0 0
        %998 = vmatpush1.bf16.msra.mxu0 0
        %999 = vmatprep.subr.bf16.mxu0 0
        %1000 = vmatpush1.bf16.msra.mxu0 0
        %1001 = vmatprep.subr.bf16.mxu0 0
        %1002 = vmatpush1.bf16.msra.mxu0 0
        %1003 = vmatprep.subr.bf16.mxu0 0
        %1004 = vmatpush1.bf16.msra.mxu0 0
        %1005 = vmatprep.subr.bf16.mxu0 0
        %1006 = vmatpush1.bf16.msra.mxu0 0
        %1007 = vmatprep.subr.bf16.mxu0 0
        %1008 = vmatpush1.bf16.msra.mxu0 0
        %1009 = vmatprep.subr.bf16.mxu0 0
        %1010 = vmatpush1.bf16.msra.mxu0 0
        %1011 = vmatprep.subr.bf16.mxu0 0
        %1012 = vmatpush1.bf16.msra.mxu0 0
        %1013 = vmatprep.subr.bf16.mxu0 0
        %1014 = vmatpush1.bf16.msra.mxu0 0
        %1015 = vmatprep.subr.bf16.mxu0 0
        %1016 = vmatpush1.bf16.msra.mxu0 0
        %1017 = vmatprep.mubr.bf16.mxu0 0
        %1018 = vmatmul.mubr.bf16.gmra.mrb[0].mxu0 %v823
        %v1019 = vpop.f32.mrb[0].mxu0
        %v1020 = vadd.f32 %v979, %v1019
        %v1021 = vpop.f32.mrb[0].mxu0
        %v1022 = vpop.f32.mrb[0].mxu0
        %v1023 = vadd.f32 %v982, %v1022
        %v1024 = vpop.f32.mrb[0].mxu0
        %1025 = vdwg.mxu0
        %v1028 = vunpack.c.l.b16 %v934
        %v1029 = vunpack.c.l.b16 %v935
        %v1030 = vpack.c.b16 %v1029, %v1028
        %v1032 = vsel %vm707, %v1030, 0
        %1034 = vmatprep.subr.bf16.mxu0 0
        %1035 = vmatpush1.bf16.msra.mxu0 %v704
        %1036 = vmatprep.subr.bf16.mxu0 0
        %1037 = vmatpush1.bf16.msra.mxu0 %v713
        %1038 = vmatprep.subr.bf16.mxu0 0
        %1039 = vmatpush1.bf16.msra.mxu0 0
        %1040 = vmatprep.subr.bf16.mxu0 0
        %1041 = vmatpush1.bf16.msra.mxu0 0
        %1042 = vmatprep.subr.bf16.mxu0 0
        %1043 = vmatpush1.bf16.msra.mxu0 0
        %1044 = vmatprep.subr.bf16.mxu0 0
        %1045 = vmatpush1.bf16.msra.mxu0 0
        %1046 = vmatprep.subr.bf16.mxu0 0
        %1047 = vmatpush1.bf16.msra.mxu0 0
        %1048 = vmatprep.subr.bf16.mxu0 0
        %1049 = vmatpush1.bf16.msra.mxu0 0
        %1050 = vmatprep.subr.bf16.mxu0 0
        %1051 = vmatpush1.bf16.msra.mxu0 0
        %1052 = vmatprep.subr.bf16.mxu0 0
        %1053 = vmatpush1.bf16.msra.mxu0 0
        %1054 = vmatprep.subr.bf16.mxu0 0
        %1055 = vmatpush1.bf16.msra.mxu0 0
        %1056 = vmatprep.subr.bf16.mxu0 0
        %1057 = vmatpush1.bf16.msra.mxu0 0
        %1058 = vmatprep.subr.bf16.mxu0 0
        %1059 = vmatpush1.bf16.msra.mxu0 0
        %1060 = vmatprep.subr.bf16.mxu0 0
        %1061 = vmatpush1.bf16.msra.mxu0 0
        %1062 = vmatprep.subr.bf16.mxu0 0
        %1063 = vmatpush1.bf16.msra.mxu0 0
        %1064 = vmatprep.subr.bf16.mxu0 0
        %1065 = vmatpush1.bf16.msra.mxu0 0
        %1066 = vmatprep.mubr.bf16.mxu0 0
        %1067 = vmatmul.mubr.bf16.gmra.mrb[0].mxu0 %v1032
        %v1068 = vpop.f32.mrb[0].mxu0
        %v1069 = vadd.f32 0.0, %v1068
        %v1070 = vpop.f32.mrb[0].mxu0
        %v1071 = vpop.f32.mrb[0].mxu0
        %v1072 = vadd.f32 0.0, %v1071
        %v1073 = vpop.f32.mrb[0].mxu0
        %1074 = vdwg.mxu0
        %1075 = vmatprep.subr.bf16.mxu0 0
        %1076 = vmatpush1.bf16.msra.mxu0 %v767
        %1077 = vmatprep.subr.bf16.mxu0 0
        %1078 = vmatpush1.bf16.msra.mxu0 %v774
        %1079 = vmatprep.subr.bf16.mxu0 0
        %1080 = vmatpush1.bf16.msra.mxu0 0
        %1081 = vmatprep.subr.bf16.mxu0 0
        %1082 = vmatpush1.bf16.msra.mxu0 0
        %1083 = vmatprep.subr.bf16.mxu0 0
        %1084 = vmatpush1.bf16.msra.mxu0 0
        %1085 = vmatprep.subr.bf16.mxu0 0
        %1086 = vmatpush1.bf16.msra.mxu0 0
        %1087 = vmatprep.subr.bf16.mxu0 0
        %1088 = vmatpush1.bf16.msra.mxu0 0
        %1089 = vmatprep.subr.bf16.mxu0 0
        %1090 = vmatpush1.bf16.msra.mxu0 0
        %1091 = vmatprep.subr.bf16.mxu0 0
        %1092 = vmatpush1.bf16.msra.mxu0 0
        %1093 = vmatprep.subr.bf16.mxu0 0
        %1094 = vmatpush1.bf16.msra.mxu0 0
        %1095 = vmatprep.subr.bf16.mxu0 0
        %1096 = vmatpush1.bf16.msra.mxu0 0
        %1097 = vmatprep.subr.bf16.mxu0 0
        %1098 = vmatpush1.bf16.msra.mxu0 0
        %1099 = vmatprep.subr.bf16.mxu0 0
        %1100 = vmatpush1.bf16.msra.mxu0 0
        %1101 = vmatprep.subr.bf16.mxu0 0
        %1102 = vmatpush1.bf16.msra.mxu0 0
        %1103 = vmatprep.subr.bf16.mxu0 0
        %1104 = vmatpush1.bf16.msra.mxu0 0
        %1105 = vmatprep.subr.bf16.mxu0 0
        %1106 = vmatpush1.bf16.msra.mxu0 0
        %1107 = vmatprep.mubr.bf16.mxu0 0
        %1108 = vmatmul.mubr.bf16.gmra.mrb[0].mxu0 %v942
        %v1109 = vpop.f32.mrb[0].mxu0
        %v1110 = vadd.f32 %v1069, %v1109
        %v1111 = vpop.f32.mrb[0].mxu0
        %v1112 = vpop.f32.mrb[0].mxu0
        %v1113 = vadd.f32 %v1072, %v1112
        %v1114 = vpop.f32.mrb[0].mxu0
        %1115 = vdwg.mxu0
        %v1116 = vmax.f32 %v1020, %v1110
        %v1117 = vmax.f32 %v1023, %v1113
        %1120 = vrot.lane.b32.xlu0 %v1116, 80
        %v1121 = vpop.permute.xlu0 %1120
        %1122 = vrot.lane.b32.xlu0 %v1117, 80
        %v1123 = vpop.permute.xlu0 %1122
        %v1126 = vmax.f32 %v1116, %v1121
        %v1127 = vmax.f32 %v1117, %v1123
        %v1128 = vadd.f32 %v1126, %v923
        %v1129 = vadd.f32 %v1127, %v923
        %v1130 = vmax.f32 %v1128, 0.0
        %v1131 = vmax.f32 %v1129, 0.0
        %v1132 = vpack.c.bf16 %v1131, %v1130
        %s1133 = scalar_lea.vmem %s579, 16 [#allocation3]
        %v1134 = vld [vmem:[%s1133] sm:$0xf]
        %v1135 = vld [vmem:[%s1133 + $0x4] sm:$0xf]
        %s1136 = scalar_lea.vmem %s572, 24 [#allocation2]
        %v1137 = vld [vmem:[%s1136] sm:$0xf]
        %v1138 = vld [vmem:[%s1136 + $0x4] sm:$0xf]
        %v1141 = vunpack.c.l.b16 %v1134
        %v1142 = vunpack.c.l.b16 %v1135
        %v1143 = vpack.c.b16 %v1142, %v1141
        %v1145 = vsel %vm707, %v1143, 0
        %1147 = vmatprep.subr.bf16.mxu0 0
        %1148 = vmatpush1.bf16.msra.mxu0 %v704
        %1149 = vmatprep.subr.bf16.mxu0 0
        %1150 = vmatpush1.bf16.msra.mxu0 %v713
        %1151 = vmatprep.subr.bf16.mxu0 0
        %1152 = vmatpush1.bf16.msra.mxu0 0
        %1153 = vmatprep.subr.bf16.mxu0 0
        %1154 = vmatpush1.bf16.msra.mxu0 0
        %1155 = vmatprep.subr.bf16.mxu0 0
        %1156 = vmatpush1.bf16.msra.mxu0 0
        %1157 = vmatprep.subr.bf16.mxu0 0
        %1158 = vmatpush1.bf16.msra.mxu0 0
        %1159 = vmatprep.subr.bf16.mxu0 0
        %1160 = vmatpush1.bf16.msra.mxu0 0
        %1161 = vmatprep.subr.bf16.mxu0 0
        %1162 = vmatpush1.bf16.msra.mxu0 0
        %1163 = vmatprep.subr.bf16.mxu0 0
        %1164 = vmatpush1.bf16.msra.mxu0 0
        %1165 = vmatprep.subr.bf16.mxu0 0
        %1166 = vmatpush1.bf16.msra.mxu0 0
        %1167 = vmatprep.subr.bf16.mxu0 0
        %1168 = vmatpush1.bf16.msra.mxu0 0
        %1169 = vmatprep.subr.bf16.mxu0 0
        %1170 = vmatpush1.bf16.msra.mxu0 0
        %1171 = vmatprep.subr.bf16.mxu0 0
        %1172 = vmatpush1.bf16.msra.mxu0 0
        %1173 = vmatprep.subr.bf16.mxu0 0
        %1174 = vmatpush1.bf16.msra.mxu0 0
        %1175 = vmatprep.subr.bf16.mxu0 0
        %1176 = vmatpush1.bf16.msra.mxu0 0
        %1177 = vmatprep.subr.bf16.mxu0 0
        %1178 = vmatpush1.bf16.msra.mxu0 0
        %1179 = vmatprep.mubr.bf16.mxu0 0
        %1180 = vmatmul.mubr.bf16.gmra.mrb[0].mxu0 %v1145
        %v1181 = vpop.f32.mrb[0].mxu0
        %v1182 = vadd.f32 0.0, %v1181
        %v1183 = vpop.f32.mrb[0].mxu0
        %v1184 = vpop.f32.mrb[0].mxu0
        %v1185 = vadd.f32 0.0, %v1184
        %v1186 = vpop.f32.mrb[0].mxu0
        %1187 = vdwg.mxu0
        %1188 = vmatprep.subr.bf16.mxu0 0
        %1189 = vmatpush1.bf16.msra.mxu0 %v767
        %1190 = vmatprep.subr.bf16.mxu0 0
        %1191 = vmatpush1.bf16.msra.mxu0 %v774
        %1192 = vmatprep.subr.bf16.mxu0 0
        %1193 = vmatpush1.bf16.msra.mxu0 0
        %1194 = vmatprep.subr.bf16.mxu0 0
        %1195 = vmatpush1.bf16.msra.mxu0 0
        %1196 = vmatprep.subr.bf16.mxu0 0
        %1197 = vmatpush1.bf16.msra.mxu0 0
        %1198 = vmatprep.subr.bf16.mxu0 0
        %1199 = vmatpush1.bf16.msra.mxu0 0
        %1200 = vmatprep.subr.bf16.mxu0 0
        %1201 = vmatpush1.bf16.msra.mxu0 0
        %1202 = vmatprep.subr.bf16.mxu0 0
        %1203 = vmatpush1.bf16.msra.mxu0 0
        %1204 = vmatprep.subr.bf16.mxu0 0
        %1205 = vmatpush1.bf16.msra.mxu0 0
        %1206 = vmatprep.subr.bf16.mxu0 0
        %1207 = vmatpush1.bf16.msra.mxu0 0
        %1208 = vmatprep.subr.bf16.mxu0 0
        %1209 = vmatpush1.bf16.msra.mxu0 0
        %1210 = vmatprep.subr.bf16.mxu0 0
        %1211 = vmatpush1.bf16.msra.mxu0 0
        %1212 = vmatprep.subr.bf16.mxu0 0
        %1213 = vmatpush1.bf16.msra.mxu0 0
        %1214 = vmatprep.subr.bf16.mxu0 0
        %1215 = vmatpush1.bf16.msra.mxu0 0
        %1216 = vmatprep.subr.bf16.mxu0 0
        %1217 = vmatpush1.bf16.msra.mxu0 0
        %1218 = vmatprep.subr.bf16.mxu0 0
        %1219 = vmatpush1.bf16.msra.mxu0 0
        %1220 = vmatprep.mubr.bf16.mxu0 0
        %1221 = vmatmul.mubr.bf16.gmra.mrb[0].mxu0 %v1032
        %v1222 = vpop.f32.mrb[0].mxu0
        %v1223 = vadd.f32 %v1182, %v1222
        %v1224 = vpop.f32.mrb[0].mxu0
        %v1225 = vpop.f32.mrb[0].mxu0
        %v1226 = vadd.f32 %v1185, %v1225
        %v1227 = vpop.f32.mrb[0].mxu0
        %1228 = vdwg.mxu0
        %v1231 = vunpack.c.l.b16 %v1137
        %v1232 = vunpack.c.l.b16 %v1138
        %v1233 = vpack.c.b16 %v1232, %v1231
        %v1235 = vsel %vm707, %v1233, 0
        %1237 = vmatprep.subr.bf16.mxu0 0
        %1238 = vmatpush1.bf16.msra.mxu0 %v704
        %1239 = vmatprep.subr.bf16.mxu0 0
        %1240 = vmatpush1.bf16.msra.mxu0 %v713
        %1241 = vmatprep.subr.bf16.mxu0 0
        %1242 = vmatpush1.bf16.msra.mxu0 0
        %1243 = vmatprep.subr.bf16.mxu0 0
        %1244 = vmatpush1.bf16.msra.mxu0 0
        %1245 = vmatprep.subr.bf16.mxu0 0
        %1246 = vmatpush1.bf16.msra.mxu0 0
        %1247 = vmatprep.subr.bf16.mxu0 0
        %1248 = vmatpush1.bf16.msra.mxu0 0
        %1249 = vmatprep.subr.bf16.mxu0 0
        %1250 = vmatpush1.bf16.msra.mxu0 0
        %1251 = vmatprep.subr.bf16.mxu0 0
        %1252 = vmatpush1.bf16.msra.mxu0 0
        %1253 = vmatprep.subr.bf16.mxu0 0
        %1254 = vmatpush1.bf16.msra.mxu0 0
        %1255 = vmatprep.subr.bf16.mxu0 0
        %1256 = vmatpush1.bf16.msra.mxu0 0
        %1257 = vmatprep.subr.bf16.mxu0 0
        %1258 = vmatpush1.bf16.msra.mxu0 0
        %1259 = vmatprep.subr.bf16.mxu0 0
        %1260 = vmatpush1.bf16.msra.mxu0 0
        %1261 = vmatprep.subr.bf16.mxu0 0
        %1262 = vmatpush1.bf16.msra.mxu0 0
        %1263 = vmatprep.subr.bf16.mxu0 0
        %1264 = vmatpush1.bf16.msra.mxu0 0
        %1265 = vmatprep.subr.bf16.mxu0 0
        %1266 = vmatpush1.bf16.msra.mxu0 0
        %1267 = vmatprep.subr.bf16.mxu0 0
        %1268 = vmatpush1.bf16.msra.mxu0 0
        %1269 = vmatprep.mubr.bf16.mxu0 0
        %1270 = vmatmul.mubr.bf16.gmra.mrb[0].mxu0 %v1235
        %v1271 = vpop.f32.mrb[0].mxu0
        %v1272 = vadd.f32 0.0, %v1271
        %v1273 = vpop.f32.mrb[0].mxu0
        %v1274 = vpop.f32.mrb[0].mxu0
        %v1275 = vadd.f32 0.0, %v1274
        %v1276 = vpop.f32.mrb[0].mxu0
        %1277 = vdwg.mxu0
        %1278 = vmatprep.subr.bf16.mxu0 0
        %1279 = vmatpush1.bf16.msra.mxu0 %v767
        %1280 = vmatprep.subr.bf16.mxu0 0
        %1281 = vmatpush1.bf16.msra.mxu0 %v774
        %1282 = vmatprep.subr.bf16.mxu0 0
        %1283 = vmatpush1.bf16.msra.mxu0 0
        %1284 = vmatprep.subr.bf16.mxu0 0
        %1285 = vmatpush1.bf16.msra.mxu0 0
        %1286 = vmatprep.subr.bf16.mxu0 0
        %1287 = vmatpush1.bf16.msra.mxu0 0
        %1288 = vmatprep.subr.bf16.mxu0 0
        %1289 = vmatpush1.bf16.msra.mxu0 0
        %1290 = vmatprep.subr.bf16.mxu0 0
        %1291 = vmatpush1.bf16.msra.mxu0 0
        %1292 = vmatprep.subr.bf16.mxu0 0
        %1293 = vmatpush1.bf16.msra.mxu0 0
        %1294 = vmatprep.subr.bf16.mxu0 0
        %1295 = vmatpush1.bf16.msra.mxu0 0
        %1296 = vmatprep.subr.bf16.mxu0 0
        %1297 = vmatpush1.bf16.msra.mxu0 0
        %1298 = vmatprep.subr.bf16.mxu0 0
        %1299 = vmatpush1.bf16.msra.mxu0 0
        %1300 = vmatprep.subr.bf16.mxu0 0
        %1301 = vmatpush1.bf16.msra.mxu0 0
        %1302 = vmatprep.subr.bf16.mxu0 0
        %1303 = vmatpush1.bf16.msra.mxu0 0
        %1304 = vmatprep.subr.bf16.mxu0 0
        %1305 = vmatpush1.bf16.msra.mxu0 0
        %1306 = vmatprep.subr.bf16.mxu0 0
        %1307 = vmatpush1.bf16.msra.mxu0 0
        %1308 = vmatprep.subr.bf16.mxu0 0
        %1309 = vmatpush1.bf16.msra.mxu0 0
        %1310 = vmatprep.mubr.bf16.mxu0 0
        %1311 = vmatmul.mubr.bf16.gmra.mrb[0].mxu0 %v1145
        %v1312 = vpop.f32.mrb[0].mxu0
        %v1313 = vadd.f32 %v1272, %v1312
        %v1314 = vpop.f32.mrb[0].mxu0
        %v1315 = vpop.f32.mrb[0].mxu0
        %v1316 = vadd.f32 %v1275, %v1315
        %v1317 = vpop.f32.mrb[0].mxu0
        %1318 = vdwg.mxu0
        %v1319 = vmax.f32 %v1223, %v1313
        %v1320 = vmax.f32 %v1226, %v1316
        %1323 = vrot.lane.b32.xlu0 %v1319, 80
        %v1324 = vpop.permute.xlu0 %1323
        %1325 = vrot.lane.b32.xlu0 %v1320, 80
        %v1326 = vpop.permute.xlu0 %1325
        %v1329 = vmax.f32 %v1319, %v1324
        %v1330 = vmax.f32 %v1320, %v1326
        %v1331 = vadd.f32 %v1329, %v923
        %v1332 = vadd.f32 %v1330, %v923
        %v1333 = vmax.f32 %v1331, 0.0
        %v1334 = vmax.f32 %v1332, 0.0
        %v1335 = vpack.c.bf16 %v1334, %v1333
        %v1342 = vunpack.c.l.b16 %v661
        %v1343 = vunpack.c.l.b16 %v662
        %v1344 = vunpack.c.l.b16 %v663
        %v1345 = vunpack.c.l.b16 %v664
        %v1346 = vunpack.c.l.b16 %v665
        %v1347 = vunpack.c.l.b16 %v666
        %v1348 = vpack.c.b16 %v1343, %v1342
        %v1349 = vpack.c.b16 %v1345, %v1344
        %v1350 = vpack.c.b16 %v1347, %v1346
        %vm1354 = vcmask 392192
        %v1356 = vsel %vm1354, %v1132, 0
        %1358 = vmatprep.subr.bf16.mxu0 0
        %1359 = vmatpush1.bf16.msra.mxu0 %v1348
        %1360 = vmatprep.subr.bf16.mxu0 0
        %1361 = vmatpush1.bf16.msra.mxu0 %v1349
        %1362 = vmatprep.subr.bf16.mxu0 0
        %1363 = vmatpush1.bf16.msra.mxu0 %v1350
        %1364 = vmatprep.subr.bf16.mxu0 0
        %1365 = vmatpush1.bf16.msra.mxu0 0
        %1366 = vmatprep.subr.bf16.mxu0 0
        %1367 = vmatpush1.bf16.msra.mxu0 0
        %1368 = vmatprep.subr.bf16.mxu0 0
        %1369 = vmatpush1.bf16.msra.mxu0 0
        %1370 = vmatprep.subr.bf16.mxu0 0
        %1371 = vmatpush1.bf16.msra.mxu0 0
        %1372 = vmatprep.subr.bf16.mxu0 0
        %1373 = vmatpush1.bf16.msra.mxu0 0
        %1374 = vmatprep.subr.bf16.mxu0 0
        %1375 = vmatpush1.bf16.msra.mxu0 0
        %1376 = vmatprep.subr.bf16.mxu0 0
        %1377 = vmatpush1.bf16.msra.mxu0 0
        %1378 = vmatprep.subr.bf16.mxu0 0
        %1379 = vmatpush1.bf16.msra.mxu0 0
        %1380 = vmatprep.subr.bf16.mxu0 0
        %1381 = vmatpush1.bf16.msra.mxu0 0
        %1382 = vmatprep.subr.bf16.mxu0 0
        %1383 = vmatpush1.bf16.msra.mxu0 0
        %1384 = vmatprep.subr.bf16.mxu0 0
        %1385 = vmatpush1.bf16.msra.mxu0 0
        %1386 = vmatprep.subr.bf16.mxu0 0
        %1387 = vmatpush1.bf16.msra.mxu0 0
        %1388 = vmatprep.subr.bf16.mxu0 0
        %1389 = vmatpush1.bf16.msra.mxu0 0
        %1390 = vmatprep.mubr.bf16.mxu0 0
        %1391 = vmatmul.mubr.bf16.gmra.mrb[0].mxu0 %v1356
        %v1392 = vpop.f32.mrb[0].mxu0
        %v1393 = vadd.f32 0.0, %v1392
        %v1394 = vpop.f32.mrb[0].mxu0
        %v1395 = vpop.f32.mrb[0].mxu0
        %v1396 = vadd.f32 0.0, %v1395
        %v1397 = vpop.f32.mrb[0].mxu0
        %1398 = vdwg.mxu0
        %v1405 = vunpack.c.l.b16 %v654
        %v1406 = vunpack.c.l.b16 %v655
        %v1407 = vunpack.c.l.b16 %v656
        %v1408 = vunpack.c.l.b16 %v657
        %v1409 = vunpack.c.l.b16 %v658
        %v1410 = vunpack.c.l.b16 %v659
        %v1411 = vpack.c.b16 %v1406, %v1405
        %v1412 = vpack.c.b16 %v1408, %v1407
        %v1413 = vpack.c.b16 %v1410, %v1409
        %v1418 = vsel %vm1354, %v929, 0
        %1420 = vmatprep.subr.bf16.mxu0 0
        %1421 = vmatpush1.bf16.msra.mxu0 %v1411
        %1422 = vmatprep.subr.bf16.mxu0 0
        %1423 = vmatpush1.bf16.msra.mxu0 %v1412
        %1424 = vmatprep.subr.bf16.mxu0 0
        %1425 = vmatpush1.bf16.msra.mxu0 %v1413
        %1426 = vmatprep.subr.bf16.mxu0 0
        %1427 = vmatpush1.bf16.msra.mxu0 0
        %1428 = vmatprep.subr.bf16.mxu0 0
        %1429 = vmatpush1.bf16.msra.mxu0 0
        %1430 = vmatprep.subr.bf16.mxu0 0
        %1431 = vmatpush1.bf16.msra.mxu0 0
        %1432 = vmatprep.subr.bf16.mxu0 0
        %1433 = vmatpush1.bf16.msra.mxu0 0
        %1434 = vmatprep.subr.bf16.mxu0 0
        %1435 = vmatpush1.bf16.msra.mxu0 0
        %1436 = vmatprep.subr.bf16.mxu0 0
        %1437 = vmatpush1.bf16.msra.mxu0 0
        %1438 = vmatprep.subr.bf16.mxu0 0
        %1439 = vmatpush1.bf16.msra.mxu0 0
        %1440 = vmatprep.subr.bf16.mxu0 0
        %1441 = vmatpush1.bf16.msra.mxu0 0
        %1442 = vmatprep.subr.bf16.mxu0 0
        %1443 = vmatpush1.bf16.msra.mxu0 0
        %1444 = vmatprep.subr.bf16.mxu0 0
        %1445 = vmatpush1.bf16.msra.mxu0 0
        %1446 = vmatprep.subr.bf16.mxu0 0
        %1447 = vmatpush1.bf16.msra.mxu0 0
        %1448 = vmatprep.subr.bf16.mxu0 0
        %1449 = vmatpush1.bf16.msra.mxu0 0
        %1450 = vmatprep.subr.bf16.mxu0 0
        %1451 = vmatpush1.bf16.msra.mxu0 0
        %1452 = vmatprep.mubr.bf16.mxu0 0
        %1453 = vmatmul.mubr.bf16.gmra.mrb[0].mxu0 %v1418
        %v1454 = vpop.f32.mrb[0].mxu0
        %v1455 = vadd.f32 %v1393, %v1454
        %v1456 = vpop.f32.mrb[0].mxu0
        %v1457 = vpop.f32.mrb[0].mxu0
        %v1458 = vadd.f32 %v1396, %v1457
        %v1459 = vpop.f32.mrb[0].mxu0
        %1460 = vdwg.mxu0
        %v1462 = vlaneseq
        %v1463 = vshrl.u32 %v1462, 7
        %v1464 = vsub.s32 0, %v1463
        %v1465 = vrot.slane %v667, %v1464
        %v1467 = vadd.f32 %v1455, %v1465
        %v1468 = vadd.f32 %v1458, %v1465
        %v1469 = vmax.f32 %v1467, 0.0
        %v1470 = vmax.f32 %v1468, 0.0
        %v1471 = vpack.c.bf16 %v1470, %v1469
        %v1473 = vsel %vm1354, %v1335, 0
        %1475 = vmatprep.subr.bf16.mxu0 0
        %1476 = vmatpush1.bf16.msra.mxu0 %v1348
        %1477 = vmatprep.subr.bf16.mxu0 0
        %1478 = vmatpush1.bf16.msra.mxu0 %v1349
        %1479 = vmatprep.subr.bf16.mxu0 0
        %1480 = vmatpush1.bf16.msra.mxu0 %v1350
        %1481 = vmatprep.subr.bf16.mxu0 0
        %1482 = vmatpush1.bf16.msra.mxu0 0
        %1483 = vmatprep.subr.bf16.mxu0 0
        %1484 = vmatpush1.bf16.msra.mxu0 0
        %1485 = vmatprep.subr.bf16.mxu0 0
        %1486 = vmatpush1.bf16.msra.mxu0 0
        %1487 = vmatprep.subr.bf16.mxu0 0
        %1488 = vmatpush1.bf16.msra.mxu0 0
        %1489 = vmatprep.subr.bf16.mxu0 0
        %1490 = vmatpush1.bf16.msra.mxu0 0
        %1491 = vmatprep.subr.bf16.mxu0 0
        %1492 = vmatpush1.bf16.msra.mxu0 0
        %1493 = vmatprep.subr.bf16.mxu0 0
        %1494 = vmatpush1.bf16.msra.mxu0 0
        %1495 = vmatprep.subr.bf16.mxu0 0
        %1496 = vmatpush1.bf16.msra.mxu0 0
        %1497 = vmatprep.subr.bf16.mxu0 0
        %1498 = vmatpush1.bf16.msra.mxu0 0
        %1499 = vmatprep.subr.bf16.mxu0 0
        %1500 = vmatpush1.bf16.msra.mxu0 0
        %1501 = vmatprep.subr.bf16.mxu0 0
        %1502 = vmatpush1.bf16.msra.mxu0 0
        %1503 = vmatprep.subr.bf16.mxu0 0
        %1504 = vmatpush1.bf16.msra.mxu0 0
        %1505 = vmatprep.subr.bf16.mxu0 0
        %1506 = vmatpush1.bf16.msra.mxu0 0
        %1507 = vmatprep.mubr.bf16.mxu0 0
        %1508 = vmatmul.mubr.bf16.gmra.mrb[0].mxu0 %v1473
        %v1509 = vpop.f32.mrb[0].mxu0
        %v1510 = vadd.f32 0.0, %v1509
        %v1511 = vpop.f32.mrb[0].mxu0
        %v1512 = vpop.f32.mrb[0].mxu0
        %v1513 = vadd.f32 0.0, %v1512
        %v1514 = vpop.f32.mrb[0].mxu0
        %1515 = vdwg.mxu0
        %1516 = vmatprep.subr.bf16.mxu0 0
        %1517 = vmatpush1.bf16.msra.mxu0 %v1411
        %1518 = vmatprep.subr.bf16.mxu0 0
        %1519 = vmatpush1.bf16.msra.mxu0 %v1412
        %1520 = vmatprep.subr.bf16.mxu0 0
        %1521 = vmatpush1.bf16.msra.mxu0 %v1413
        %1522 = vmatprep.subr.bf16.mxu0 0
        %1523 = vmatpush1.bf16.msra.mxu0 0
        %1524 = vmatprep.subr.bf16.mxu0 0
        %1525 = vmatpush1.bf16.msra.mxu0 0
        %1526 = vmatprep.subr.bf16.mxu0 0
        %1527 = vmatpush1.bf16.msra.mxu0 0
        %1528 = vmatprep.subr.bf16.mxu0 0
        %1529 = vmatpush1.bf16.msra.mxu0 0
        %1530 = vmatprep.subr.bf16.mxu0 0
        %1531 = vmatpush1.bf16.msra.mxu0 0
        %1532 = vmatprep.subr.bf16.mxu0 0
        %1533 = vmatpush1.bf16.msra.mxu0 0
        %1534 = vmatprep.subr.bf16.mxu0 0
        %1535 = vmatpush1.bf16.msra.mxu0 0
        %1536 = vmatprep.subr.bf16.mxu0 0
        %1537 = vmatpush1.bf16.msra.mxu0 0
        %1538 = vmatprep.subr.bf16.mxu0 0
        %1539 = vmatpush1.bf16.msra.mxu0 0
        %1540 = vmatprep.subr.bf16.mxu0 0
        %1541 = vmatpush1.bf16.msra.mxu0 0
        %1542 = vmatprep.subr.bf16.mxu0 0
        %1543 = vmatpush1.bf16.msra.mxu0 0
        %1544 = vmatprep.subr.bf16.mxu0 0
        %1545 = vmatpush1.bf16.msra.mxu0 0
        %1546 = vmatprep.subr.bf16.mxu0 0
        %1547 = vmatpush1.bf16.msra.mxu0 0
        %1548 = vmatprep.mubr.bf16.mxu0 0
        %1549 = vmatmul.mubr.bf16.gmra.mrb[0].mxu0 %v1356
        %v1550 = vpop.f32.mrb[0].mxu0
        %v1551 = vadd.f32 %v1510, %v1550
        %v1552 = vpop.f32.mrb[0].mxu0
        %v1553 = vpop.f32.mrb[0].mxu0
        %v1554 = vadd.f32 %v1513, %v1553
        %v1555 = vpop.f32.mrb[0].mxu0
        %1556 = vdwg.mxu0
        %v1557 = vadd.f32 %v1551, %v1465
        %v1558 = vadd.f32 %v1554, %v1465
        %v1559 = vmax.f32 %v1557, 0.0
        %v1560 = vmax.f32 %v1558, 0.0
        %v1561 = vpack.c.bf16 %v1560, %v1559
        %v1570 = vunpack.c.l.b16 %v677
        %v1571 = vunpack.c.l.b16 %v678
        %v1572 = vunpack.c.l.b16 %v679
        %v1573 = vunpack.c.l.b16 %v680
        %v1574 = vunpack.c.l.b16 %v681
        %v1575 = vunpack.c.l.b16 %v682
        %v1576 = vunpack.c.l.b16 %v683
        %v1577 = vunpack.c.l.b16 %v684
        %v1578 = vpack.c.b16 %v1571, %v1570
        %v1579 = vpack.c.b16 %v1573, %v1572
        %v1580 = vpack.c.b16 %v1575, %v1574
        %v1581 = vpack.c.b16 %v1577, %v1576
        %vm1586 = vcmask 523264
        %v1588 = vsel %vm1586, %v1561, 0
        %1590 = vmatprep.subr.bf16.mxu0 0
        %1591 = vmatpush1.bf16.msra.mxu0 %v1578
        %1592 = vmatprep.subr.bf16.mxu0 0
        %1593 = vmatpush1.bf16.msra.mxu0 %v1579
        %1594 = vmatprep.subr.bf16.mxu0 0
        %1595 = vmatpush1.bf16.msra.mxu0 %v1580
        %1596 = vmatprep.subr.bf16.mxu0 0
        %1597 = vmatpush1.bf16.msra.mxu0 %v1581
        %1598 = vmatprep.subr.bf16.mxu0 0
        %1599 = vmatpush1.bf16.msra.mxu0 0
        %1600 = vmatprep.subr.bf16.mxu0 0
        %1601 = vmatpush1.bf16.msra.mxu0 0
        %1602 = vmatprep.subr.bf16.mxu0 0
        %1603 = vmatpush1.bf16.msra.mxu0 0
        %1604 = vmatprep.subr.bf16.mxu0 0
        %1605 = vmatpush1.bf16.msra.mxu0 0
        %1606 = vmatprep.subr.bf16.mxu0 0
        %1607 = vmatpush1.bf16.msra.mxu0 0
        %1608 = vmatprep.subr.bf16.mxu0 0
        %1609 = vmatpush1.bf16.msra.mxu0 0
        %1610 = vmatprep.subr.bf16.mxu0 0
        %1611 = vmatpush1.bf16.msra.mxu0 0
        %1612 = vmatprep.subr.bf16.mxu0 0
        %1613 = vmatpush1.bf16.msra.mxu0 0
        %1614 = vmatprep.subr.bf16.mxu0 0
        %1615 = vmatpush1.bf16.msra.mxu0 0
        %1616 = vmatprep.subr.bf16.mxu0 0
        %1617 = vmatpush1.bf16.msra.mxu0 0
        %1618 = vmatprep.subr.bf16.mxu0 0
        %1619 = vmatpush1.bf16.msra.mxu0 0
        %1620 = vmatprep.subr.bf16.mxu0 0
        %1621 = vmatpush1.bf16.msra.mxu0 0
        %1622 = vmatprep.mubr.bf16.mxu0 0
        %1623 = vmatmul.mubr.bf16.gmra.mrb[0].mxu0 %v1588
        %v1624 = vpop.f32.mrb[0].mxu0
        %v1625 = vadd.f32 0.0, %v1624
        %v1626 = vpop.f32.mrb[0].mxu0
        %v1627 = vpop.f32.mrb[0].mxu0
        %v1628 = vadd.f32 0.0, %v1627
        %v1629 = vpop.f32.mrb[0].mxu0
        %1630 = vdwg.mxu0
        %v1639 = vunpack.c.l.b16 %v668
        %v1640 = vunpack.c.l.b16 %v669
        %v1641 = vunpack.c.l.b16 %v670
        %v1642 = vunpack.c.l.b16 %v671
        %v1643 = vunpack.c.l.b16 %v672
        %v1644 = vunpack.c.l.b16 %v673
        %v1645 = vunpack.c.l.b16 %v674
        %v1646 = vunpack.c.l.b16 %v675
        %v1647 = vpack.c.b16 %v1640, %v1639
        %v1648 = vpack.c.b16 %v1642, %v1641
        %v1649 = vpack.c.b16 %v1644, %v1643
        %v1650 = vpack.c.b16 %v1646, %v1645
        %v1656 = vsel %vm1586, %v1471, 0
        %1658 = vmatprep.subr.bf16.mxu0 0
        %1659 = vmatpush1.bf16.msra.mxu0 %v1647
        %1660 = vmatprep.subr.bf16.mxu0 0
        %1661 = vmatpush1.bf16.msra.mxu0 %v1648
        %1662 = vmatprep.subr.bf16.mxu0 0
        %1663 = vmatpush1.bf16.msra.mxu0 %v1649
        %1664 = vmatprep.subr.bf16.mxu0 0
        %1665 = vmatpush1.bf16.msra.mxu0 %v1650
        %1666 = vmatprep.subr.bf16.mxu0 0
        %1667 = vmatpush1.bf16.msra.mxu0 0
        %1668 = vmatprep.subr.bf16.mxu0 0
        %1669 = vmatpush1.bf16.msra.mxu0 0
        %1670 = vmatprep.subr.bf16.mxu0 0
        %1671 = vmatpush1.bf16.msra.mxu0 0
        %1672 = vmatprep.subr.bf16.mxu0 0
        %1673 = vmatpush1.bf16.msra.mxu0 0
        %1674 = vmatprep.subr.bf16.mxu0 0
        %1675 = vmatpush1.bf16.msra.mxu0 0
        %1676 = vmatprep.subr.bf16.mxu0 0
        %1677 = vmatpush1.bf16.msra.mxu0 0
        %1678 = vmatprep.subr.bf16.mxu0 0
        %1679 = vmatpush1.bf16.msra.mxu0 0
        %1680 = vmatprep.subr.bf16.mxu0 0
        %1681 = vmatpush1.bf16.msra.mxu0 0
        %1682 = vmatprep.subr.bf16.mxu0 0
        %1683 = vmatpush1.bf16.msra.mxu0 0
        %1684 = vmatprep.subr.bf16.mxu0 0
        %1685 = vmatpush1.bf16.msra.mxu0 0
        %1686 = vmatprep.subr.bf16.mxu0 0
        %1687 = vmatpush1.bf16.msra.mxu0 0
        %1688 = vmatprep.subr.bf16.mxu0 0
        %1689 = vmatpush1.bf16.msra.mxu0 0
        %1690 = vmatprep.mubr.bf16.mxu0 0
        %1691 = vmatmul.mubr.bf16.gmra.mrb[0].mxu0 %v1656
        %v1692 = vpop.f32.mrb[0].mxu0
        %v1693 = vadd.f32 %v1625, %v1692
        %v1694 = vpop.f32.mrb[0].mxu0
        %v1695 = vpop.f32.mrb[0].mxu0
        %v1696 = vadd.f32 %v1628, %v1695
        %v1697 = vpop.f32.mrb[0].mxu0
        %1698 = vdwg.mxu0
        %v1700 = vlaneseq
        %v1701 = vshrl.u32 %v1700, 7
        %v1702 = vsub.s32 0, %v1701
        %v1703 = vrot.slane %v685, %v1702
        %v1705 = vadd.f32 %v1693, %v1703
        %v1706 = vadd.f32 %v1696, %v1703
        %v1707 = vmax.f32 %v1705, 0.0
        %v1708 = vmax.f32 %v1706, 0.0
        %v1709 = vpack.c.bf16 %v1708, %v1707
        %v1710 = vld [vmem:[%s9] sm:$0xf]
        %v1711 = vld [vmem:[%s9 + $0x4] sm:$0xf]
        %v1712 = vld [vmem:[%s9 + $0x8] sm:$0xf]
        %v1713 = vld [vmem:[%s9 + $0xc] sm:$0xf]
        %v1714 = vld [vmem:[%s9 + $0x10] sm:$0xf]
        %v1715 = vld [vmem:[%s9 + $0x14] sm:$0xf]
        %v1716 = vld [vmem:[%s9 + $0x18] sm:$0xf]
        %v1717 = vld [vmem:[%s9 + $0x1c] sm:$0xf]
        %v1718 = vld [vmem:[%s637] sm:$0xf]
        %v1719 = vld [vmem:[%s637 + $0x4] sm:$0xf]
        %v1720 = vld [vmem:[%s10] sm:$0xf]
        %v1723 = vunpack.c.l.b16 %v1718
        %v1724 = vunpack.c.l.b16 %v1719
        %v1725 = vpack.c.b16 %v1724, %v1723
        %vm1726 = vcmask 64512
        %v1728 = vsel %vm1726, %v1725, 0
        %v1731 = vsel %vm711, %v1720, 0
        %1733 = vmatprep.subr.bf16.mxu0 0
        %1734 = vmatpush1.bf16.msra.mxu0 %v1731
        %1735 = vmatprep.subr.bf16.mxu0 0
        %1736 = vmatpush1.bf16.msra.mxu0 0
        %1737 = vmatprep.subr.bf16.mxu0 0
        %1738 = vmatpush1.bf16.msra.mxu0 0
        %1739 = vmatprep.subr.bf16.mxu0 0
        %1740 = vmatpush1.bf16.msra.mxu0 0
        %1741 = vmatprep.subr.bf16.mxu0 0
        %1742 = vmatpush1.bf16.msra.mxu0 0
        %1743 = vmatprep.subr.bf16.mxu0 0
        %1744 = vmatpush1.bf16.msra.mxu0 0
        %1745 = vmatprep.subr.bf16.mxu0 0
        %1746 = vmatpush1.bf16.msra.mxu0 0
        %1747 = vmatprep.subr.bf16.mxu0 0
        %1748 = vmatpush1.bf16.msra.mxu0 0
        %1749 = vmatprep.subr.bf16.mxu0 0
        %1750 = vmatpush1.bf16.msra.mxu0 0
        %1751 = vmatprep.subr.bf16.mxu0 0
        %1752 = vmatpush1.bf16.msra.mxu0 0
        %1753 = vmatprep.subr.bf16.mxu0 0
        %1754 = vmatpush1.bf16.msra.mxu0 0
        %1755 = vmatprep.subr.bf16.mxu0 0
        %1756 = vmatpush1.bf16.msra.mxu0 0
        %1757 = vmatprep.subr.bf16.mxu0 0
        %1758 = vmatpush1.bf16.msra.mxu0 0
        %1759 = vmatprep.subr.bf16.mxu0 0
        %1760 = vmatpush1.bf16.msra.mxu0 0
        %1761 = vmatprep.subr.bf16.mxu0 0
        %1762 = vmatpush1.bf16.msra.mxu0 0
        %1763 = vmatprep.subr.bf16.mxu0 0
        %1764 = vmatpush1.bf16.msra.mxu0 0
        %1765 = vmatprep.mubr.bf16.mxu0 0
        %1766 = vmatmul.mubr.bf16.gmra.mrb[0].mxu0 %v1728
        %v1767 = vpop.f32.mrb[0].mxu0
        %v1768 = vadd.f32 0.0, %v1767
        %v1769 = vpop.f32.mrb[0].mxu0
        %v1770 = vpop.f32.mrb[0].mxu0
        %v1771 = vadd.f32 0.0, %v1770
        %v1772 = vpop.f32.mrb[0].mxu0
        %1773 = vdwg.mxu0
        %v1782 = vunpack.c.l.b16 %v1710
        %v1783 = vunpack.c.l.b16 %v1711
        %v1784 = vunpack.c.l.b16 %v1712
        %v1785 = vunpack.c.l.b16 %v1713
        %v1786 = vunpack.c.l.b16 %v1714
        %v1787 = vunpack.c.l.b16 %v1715
        %v1788 = vunpack.c.l.b16 %v1716
        %v1789 = vunpack.c.l.b16 %v1717
        %v1790 = vpack.c.b16 %v1783, %v1782
        %v1791 = vpack.c.b16 %v1785, %v1784
        %v1792 = vpack.c.b16 %v1787, %v1786
        %v1793 = vpack.c.b16 %v1789, %v1788
        %v1799 = vsel %vm1586, %v1709, 0
        %1801 = vmatprep.subr.bf16.mxu0 0
        %1802 = vmatpush1.bf16.msra.mxu0 %v1790
        %1803 = vmatprep.subr.bf16.mxu0 0
        %1804 = vmatpush1.bf16.msra.mxu0 %v1791
        %1805 = vmatprep.subr.bf16.mxu0 0
        %1806 = vmatpush1.bf16.msra.mxu0 %v1792
        %1807 = vmatprep.subr.bf16.mxu0 0
        %1808 = vmatpush1.bf16.msra.mxu0 %v1793
        %1809 = vmatprep.subr.bf16.mxu0 0
        %1810 = vmatpush1.bf16.msra.mxu0 0
        %1811 = vmatprep.subr.bf16.mxu0 0
        %1812 = vmatpush1.bf16.msra.mxu0 0
        %1813 = vmatprep.subr.bf16.mxu0 0
        %1814 = vmatpush1.bf16.msra.mxu0 0
        %1815 = vmatprep.subr.bf16.mxu0 0
        %1816 = vmatpush1.bf16.msra.mxu0 0
        %1817 = vmatprep.subr.bf16.mxu0 0
        %1818 = vmatpush1.bf16.msra.mxu0 0
        %1819 = vmatprep.subr.bf16.mxu0 0
        %1820 = vmatpush1.bf16.msra.mxu0 0
        %1821 = vmatprep.subr.bf16.mxu0 0
        %1822 = vmatpush1.bf16.msra.mxu0 0
        %1823 = vmatprep.subr.bf16.mxu0 0
        %1824 = vmatpush1.bf16.msra.mxu0 0
        %1825 = vmatprep.subr.bf16.mxu0 0
        %1826 = vmatpush1.bf16.msra.mxu0 0
        %1827 = vmatprep.subr.bf16.mxu0 0
        %1828 = vmatpush1.bf16.msra.mxu0 0
        %1829 = vmatprep.subr.bf16.mxu0 0
        %1830 = vmatpush1.bf16.msra.mxu0 0
        %1831 = vmatprep.subr.bf16.mxu0 0
        %1832 = vmatpush1.bf16.msra.mxu0 0
        %1833 = vmatprep.mubr.bf16.mxu0 0
        %1834 = vmatmul.mubr.bf16.gmra.mrb[0].mxu0 %v1799
        %v1835 = vpop.f32.mrb[0].mxu0
        %v1836 = vadd.f32 %v1768, %v1835
        %v1837 = vpop.f32.mrb[0].mxu0
        %v1838 = vpop.f32.mrb[0].mxu0
        %v1839 = vadd.f32 %v1771, %v1838
        %v1840 = vpop.f32.mrb[0].mxu0
        %1841 = vdwg.mxu0
        %v1842 = vld [vmem:[%s11] sm:$0x1]
        %v1844 = vlaneseq
        %v1845 = vshrl.u32 %v1844, 7
        %v1846 = vsub.s32 0, %v1845
        %v1847 = vrot.slane %v1842, %v1846
        %v1849 = vadd.f32 %v1836, %v1847
        %v1850 = vadd.f32 %v1839, %v1847
        %v1851 = vtanh.pop %v1849
        %v1852 = vtanh.pop %v1850
        %v1853 = vpack.c.bf16 %v1852, %v1851
        %v1854 = vld [vmem:[%s12] sm:$0xf]
        %v1855 = vld [vmem:[%s12 + $0x4] sm:$0xf]
        %v1856 = vld [vmem:[%s12 + $0x8] sm:$0xf]
        %v1857 = vld [vmem:[%s12 + $0xc] sm:$0xf]
        %v1858 = vld [vmem:[%s12 + $0x10] sm:$0xf]
        %v1859 = vld [vmem:[%s12 + $0x14] sm:$0xf]
        %v1860 = vld [vmem:[%s12 + $0x18] sm:$0xf]
        %v1861 = vld [vmem:[%s12 + $0x1c] sm:$0xf]
        %v1862 = vld [vmem:[%s12 + $0x20] sm:$0xf]
        %v1863 = vld [vmem:[%s12 + $0x24] sm:$0xf]
        %v1864 = vld [vmem:[%s12 + $0x28] sm:$0xf]
        %v1865 = vld [vmem:[%s12 + $0x2c] sm:$0xf]
        %v1866 = vld [vmem:[%s12 + $0x30] sm:$0xf]
        %v1867 = vld [vmem:[%s12 + $0x34] sm:$0xf]
        %v1868 = vld [vmem:[%s12 + $0x38] sm:$0xf]
        %v1869 = vld [vmem:[%s12 + $0x3c] sm:$0xf]
        %v1870 = vld [vmem:[%s13] sm:$0x1]
        %v1872 = vlaneseq
        %v1873 = vshrl.u32 %v1872, 7
        %v1874 = vsub.s32 0, %v1873
        %v1875 = vrot.slane %v1870, %v1874
        %v1893 = vunpack.c.l.b16 %v1854
        %v1894 = vunpack.c.l.b16 %v1855
        %v1895 = vunpack.c.l.b16 %v1856
        %v1896 = vunpack.c.l.b16 %v1857
        %v1897 = vunpack.c.l.b16 %v1858
        %v1898 = vunpack.c.l.b16 %v1859
        %v1899 = vunpack.c.l.b16 %v1860
        %v1900 = vunpack.c.l.b16 %v1861
        %v1901 = vunpack.c.l.b16 %v1862
        %v1902 = vunpack.c.l.b16 %v1863
        %v1903 = vunpack.c.l.b16 %v1864
        %v1904 = vunpack.c.l.b16 %v1865
        %v1905 = vunpack.c.l.b16 %v1866
        %v1906 = vunpack.c.l.b16 %v1867
        %v1907 = vunpack.c.l.b16 %v1868
        %v1908 = vunpack.c.l.b16 %v1869
        %v1909 = vpack.c.b16 %v1894, %v1893
        %v1910 = vpack.c.b16 %v1896, %v1895
        %v1911 = vpack.c.b16 %v1898, %v1897
        %v1912 = vpack.c.b16 %v1900, %v1899
        %v1913 = vpack.c.b16 %v1902, %v1901
        %v1914 = vpack.c.b16 %v1904, %v1903
        %v1915 = vpack.c.b16 %v1906, %v1905
        %v1916 = vpack.c.b16 %v1908, %v1907
        %1925 = vmatprep.subr.bf16.mxu0 0
        %1926 = vmatpush1.bf16.msra.mxu0 %v1909
        %1927 = vmatprep.subr.bf16.mxu0 0
        %1928 = vmatpush1.bf16.msra.mxu0 %v1910
        %1929 = vmatprep.subr.bf16.mxu0 0
        %1930 = vmatpush1.bf16.msra.mxu0 %v1911
        %1931 = vmatprep.subr.bf16.mxu0 0
        %1932 = vmatpush1.bf16.msra.mxu0 %v1912
        %1933 = vmatprep.subr.bf16.mxu0 0
        %1934 = vmatpush1.bf16.msra.mxu0 %v1913
        %1935 = vmatprep.subr.bf16.mxu0 0
        %1936 = vmatpush1.bf16.msra.mxu0 %v1914
        %1937 = vmatprep.subr.bf16.mxu0 0
        %1938 = vmatpush1.bf16.msra.mxu0 %v1915
        %1939 = vmatprep.subr.bf16.mxu0 0
        %1940 = vmatpush1.bf16.msra.mxu0 %v1916
        %1941 = vmatprep.subr.bf16.mxu0 0
        %1942 = vmatpush1.bf16.msra.mxu0 0
        %1943 = vmatprep.subr.bf16.mxu0 0
        %1944 = vmatpush1.bf16.msra.mxu0 0
        %1945 = vmatprep.subr.bf16.mxu0 0
        %1946 = vmatpush1.bf16.msra.mxu0 0
        %1947 = vmatprep.subr.bf16.mxu0 0
        %1948 = vmatpush1.bf16.msra.mxu0 0
        %1949 = vmatprep.subr.bf16.mxu0 0
        %1950 = vmatpush1.bf16.msra.mxu0 0
        %1951 = vmatprep.subr.bf16.mxu0 0
        %1952 = vmatpush1.bf16.msra.mxu0 0
        %1953 = vmatprep.subr.bf16.mxu0 0
        %1954 = vmatpush1.bf16.msra.mxu0 0
        %1955 = vmatprep.subr.bf16.mxu0 0
        %1956 = vmatpush1.bf16.msra.mxu0 0
        %1957 = vmatprep.mubr.bf16.mxu0 0
        %1958 = vmatmul.mubr.bf16.gmra.mrb[0].mxu0 %v1853
        %v1959 = vpop.f32.mrb[0].mxu0
        %v1960 = vadd.f32 %v1875, %v1959
        %v1961 = vpop.f32.mrb[0].mxu0
        %v1962 = vpop.f32.mrb[0].mxu0
        %v1963 = vadd.f32 %v1875, %v1962
        %v1964 = vpop.f32.mrb[0].mxu0
        %1965 = vdwg.mxu0
        %v1966 = vlaneseq
        %v1967 = vand.u32 %v1966, 127
        %vm1968 = vcmp.lt.s32.totalorder %v1967, 4
        %v1969 = vsel %vm1968, %v1960, -1e+30
        %v1970 = vsel %vm1968, %v1963, -1e+30
        %1971 = vmax.xlane.f32.xlu0 %v1969
        %v1972 = vpop.xlane.xlu0 %1971
        %1973 = vmax.xlane.f32.xlu0 %v1970
        %v1974 = vpop.xlane.xlu0 %1973
        %v1975 = vsub.f32 %v1960, %v1972
        %v1976 = vsub.f32 %v1963, %v1974
        %v1977 = vmul.f32 %v1975, 1.442695
        %v1978 = vpow.pop %v1977
        %v1979 = vmul.f32 %v1976, 1.442695
        %v1980 = vpow.pop %v1979
        %v1981 = vsel %vm1968, %v1978, 0.0
        %v1982 = vsel %vm1968, %v1980, 0.0
        %1983 = vadd.xlane.f32.xlu0 %v1981
        %v1984 = vpop.xlane.xlu0 %1983
        %1985 = vadd.xlane.f32.xlu0 %v1982
        %v1986 = vpop.xlane.xlu0 %1985
        %v1987 = vlog2.pop %v1984
        %v1988 = vmul.f32 %v1987, 0.6931472
        %v1989 = vlog2.pop %v1986
        %v1990 = vmul.f32 %v1989, 0.6931472
        %v1991 = vsub.f32 %v1975, %v1988
        %v1992 = vsub.f32 %v1976, %v1990
        %vm1993 = vcmp.eq.s32.totalorder %v1967, 4
        %v1994 = vsel %vm1993, %v1960, 0.0
        %v1995 = vsel %vm1993, %v1963, 0.0
        %v1996 = vsel %vm1968, %v1991, %v1994
        %v1997 = vsel %vm1968, %v1992, %v1995
        %1998 = vst [vmem:[%s643] sm:$0xff] %v1996
        %1999 = vst [vmem:[%s643 + $0x8] sm:$0xff] %v1997
        %s2000 = smul.u32 2, %s25
        %p2001 = scmp.lt.s32.totalorder %s2000, 3
        %s2002 = scalar_select %p2001, %s2000, 3
        %s2003 = smul.addr %s2002, 8
        %s2004 = scalar_lea.vmem %s14, %s2003
        // Predicated region
        $region159: #{acmodel_sr_forward.1} parent=149 // pred_check
          %p2005 = pneg %p352
        $region160: #{acmodel_sr_forward.1} parent=149 // pred_check_branch
          %2007 = sbr.rel (%p2005) target = $region162
        $region161: #{acmodel_sr_forward.1} parent=149 // pred_region
          %s2008 = smul.u32 2, %s25
        $region162: #{acmodel_sr_forward.1} parent=149 // pred_fallthru
          _
      $region150: #{acmodel_sr_forward.1} parent=5 // pred_fallthru
        _
      %p2009 = scmp.le.s32.totalorder 2, %s20
      // Predicated region
      $region163: #{acmodel_sr_forward.1} parent=5 // pred_check
        %p2010 = pneg %p2009
      $region164: #{acmodel_sr_forward.1} parent=5 // pred_check_branch
        %2012 = sbr.rel (%p2010) target = $region166
      $region165: #{acmodel_sr_forward.1} parent=5 // pred_region
        %s2013 = ssub.s32 %s20, 2
        // Predicated region
        $region167: #{acmodel_sr_forward.1} parent=165 // pred_check
          %p2014 = pneg %p358
        $region168: #{acmodel_sr_forward.1} parent=165 // pred_check_branch
          %2016 = sbr.rel (%p2014) target = $region170
        $region169: #{acmodel_sr_forward.1} parent=165 // pred_region
          %s2017 = smul.u32 2, %s26
          %p2018 = scmp.lt.s32.totalorder %s2017, 3
          %s2019 = scalar_select %p2018, %s2017, 3
          %s2020 = smul.addr %s2019, 8
          %s2021 = scalar_lea.vmem %s14, %s2020
        $region170: #{acmodel_sr_forward.1} parent=165 // pred_fallthru
          _
      $region166: #{acmodel_sr_forward.1} parent=5 // pred_fallthru
        _
    $region6: #{acmodel_sr_forward.1} parent=1 // loop_footer
      %s24 = sadd.s32 1, %s20
    $region7: #{acmodel_sr_forward.1} parent=1 // loop_footer_branch
      %19 = sbr.rel target = $region3
    $region8: #{acmodel_sr_forward.1} parent=1 // loop_exit
      _

</llo_original>
